<compile_context>
chip_gen: v6e
topology: v6e:2x2x1
jax: 0.10.0
libtpu: 0.0.40
codegen_flags: <defaults>
</compile_context>

<pallas_src>
import functools
import numpy as np
import jax
import jax.numpy as jnp
from jax.experimental import pallas as pl
from jax.experimental.pallas import tpu as pltpu


# ----------------------------------------------------------------------------
# Deterministic constant construction (glue, plain numpy)
# ----------------------------------------------------------------------------
def _hann_periodic(n):
    k = np.arange(n, dtype=np.float64)
    return 0.5 * (1.0 - np.cos(2.0 * np.pi * k / n))


def _hz_to_mel_slaney(f):
    f = np.asarray(f, dtype=np.float64)
    f_sp = 200.0 / 3.0
    mels = f / f_sp
    min_log_hz = 1000.0
    min_log_mel = min_log_hz / f_sp
    logstep = np.log(6.4) / 27.0
    safe_f = np.maximum(f, 1e-10)
    return np.where(f >= min_log_hz,
                    min_log_mel + np.log(safe_f / min_log_hz) / logstep,
                    mels)


def _mel_to_hz_slaney(m):
    m = np.asarray(m, dtype=np.float64)
    f_sp = 200.0 / 3.0
    freqs = f_sp * m
    min_log_hz = 1000.0
    min_log_mel = min_log_hz / f_sp
    logstep = np.log(6.4) / 27.0
    return np.where(m >= min_log_mel,
                    min_log_hz * np.exp(logstep * (m - min_log_mel)),
                    freqs)


def _melscale_fbanks_slaney(n_freqs, f_min, f_max, n_mels, sample_rate):
    # Mirrors torchaudio.functional.melscale_fbanks(norm='slaney',
    # mel_scale='slaney').
    all_freqs = np.linspace(0.0, sample_rate // 2, n_freqs)
    m_min = _hz_to_mel_slaney(f_min)
    m_max = _hz_to_mel_slaney(f_max)
    m_pts = np.linspace(m_min, m_max, n_mels + 2)
    f_pts = _mel_to_hz_slaney(m_pts)
    f_diff = f_pts[1:] - f_pts[:-1]                       # (n_mels+1,)
    slopes = f_pts[None, :] - all_freqs[:, None]          # (n_freqs, n_mels+2)
    down = -slopes[:, :-2] / f_diff[:-1]
    up = slopes[:, 2:] / f_diff[1:]
    fb = np.maximum(0.0, np.minimum(down, up))            # (n_freqs, n_mels)
    enorm = 2.0 / (f_pts[2:n_mels + 2] - f_pts[:n_mels])  # slaney area norm
    fb = fb * enorm[None, :]
    return fb.astype(np.float32)


def _windowed_dft_matrices(n_fft):
    # Onesided real DFT matrices with the hann window folded in.
    n_freqs = n_fft // 2 + 1
    n = np.arange(n_fft, dtype=np.float64)[:, None]
    k = np.arange(n_freqs, dtype=np.float64)[None, :]
    ang = 2.0 * np.pi * n * k / n_fft
    w = _hann_periodic(n_fft)[:, None]
    cos_m = (w * np.cos(ang)).astype(np.float32)   # (n_fft, n_freqs)
    sin_m = (w * np.sin(ang)).astype(np.float32)   # sign irrelevant: |.|^2
    return cos_m, sin_m


def _round_up(x, m):
    return ((x + m - 1) // m) * m


def _cdiv(a, b):
    return (a + b - 1) // b


def _pick_frame_tile(n_frames, requested, batch):
    """Frame-tile selection: big tiles (few grid steps), but keep >=2 total
    grid cells for v7x's two TensorCores without introducing extra padded
    frame rows (so the rule costs nothing on 1-TC v5e/v6e)."""
    ft = max(128, _round_up(int(requested), 128))
    nfr_ceil = _round_up(n_frames, 128)
    ft = min(ft, nfr_ceil)
    if batch * _cdiv(nfr_ceil, ft) < 2 and nfr_ceil > 128:
        m = nfr_ceil // 128
        best = 1
        for d in range(1, m // 2 + 1):     # largest divisor of m that is <= m//2
            if m % d == 0:
                best = d
        ft = 128 * best                    # divides nfr_ceil -> no extra padding
    return ft


# ----------------------------------------------------------------------------
# Pallas kernel: windowed DFT + power + mel projection + log, fused.
# ----------------------------------------------------------------------------
def _lms_kernel(frames_ref, dft_ref, mel_ref, out_ref, *, log_offset, nf_p):
    f = frames_ref[...]                                   # (TM, n_fft) bf16
    # Single MXU pass for [cos | sin] (bf16 inputs, f32 accumulation).
    spec = jnp.dot(f, dft_ref[...], preferred_element_type=jnp.float32)
    re = spec[:, :nf_p]
    im = spec[:, nf_p:]
    power = re * re + im * im                             # (TM, NF_P) f32
    # Mel projection kept in f32 (small K/N; preserves quiet-frame fidelity).
    mel = jnp.dot(power, mel_ref[...], preferred_element_type=jnp.float32)
    # Write the (n_mels, frames) layout directly; transpose rides the XLU slot
    # and the output block stays lane-dense (last dim = frame_tile).
    out_ref[...] = jnp.log(mel + log_offset).T            # (NMEL_P, TM)


# ----------------------------------------------------------------------------
# Wrapper
# ----------------------------------------------------------------------------
def log_mel_spectrogram(waveform,
                        sample_rate=16000,
                        win_length_s=0.025,
                        hop_length_s=0.01,
                        f_min=0.0,
                        f_max=None,
                        n_mels=128,
                        log_offset=0.001,
                        frame_tile=1024):
    """waveform: (B, T) float32 -> (B, n_mels, n_frames) float32."""
    if f_max is None:
        f_max = sample_rate // 2
    win_length = int(np.round(sample_rate * win_length_s))
    n_fft = win_length
    hop = int(np.round(sample_rate * hop_length_s))
    n_freqs = n_fft // 2 + 1

    B, T = waveform.shape
    n_frames = 1 + (T - n_fft) // hop
    assert n_frames >= 1, "waveform too short for a single frame (center=False)"

    # --- tile / padded-frame-count selection ---
    frame_tile = _pick_frame_tile(n_frames, frame_tile, B)
    NFR_P = _round_up(n_frames, frame_tile)

    # --- frame extraction via hop-sized chunks + strided slices (no gather).
    #     Produces the padded (B, NFR_P, n_fft) bf16 tensor directly: no
    #     zeros+scatter pass, no lane padding of the frame axis in HBM. ---
    n_full = n_fft // hop
    rem = n_fft % hop
    n_chunks = NFR_P + n_full
    T_pad = n_chunks * hop
    wav = waveform.astype(jnp.bfloat16)
    if T_pad > T:
        wav = jnp.pad(wav, ((0, 0), (0, T_pad - T)))
    else:
        wav = wav[:, :T_pad]                   # drops only samples no frame uses
    chunks = wav.reshape(B, n_chunks, hop)
    parts = [chunks[:, k:k + NFR_P, :] for k in range(n_full)]
    if rem:
        parts.append(chunks[:, n_full:n_full + NFR_P, :rem])
    frames = jnp.concatenate(parts, axis=-1)   # (B, NFR_P, n_fft) bf16

    # --- deterministic constant matrices ---
    cos_m, sin_m = _windowed_dft_matrices(n_fft)   # (n_fft, n_freqs) f32
    mel_fb = _melscale_fbanks_slaney(n_freqs, f_min, f_max, n_mels, sample_rate)

    NF_P = _round_up(n_freqs, 128)
    NMEL_P = _round_up(n_mels, 128)

    # cos and sin fused into one RHS so the LHS goes through the MXU once.
    # K dim stays at n_fft (=400); Mosaic pads lanes in VMEM.
    dft_np = np.zeros((n_fft, 2 * NF_P), np.float32)
    dft_np[:, :n_freqs] = cos_m
    dft_np[:, NF_P:NF_P + n_freqs] = sin_m
    dft_p = jnp.asarray(dft_np, dtype=jnp.bfloat16)        # (n_fft, 2*NF_P)

    mel_np = np.zeros((NF_P, NMEL_P), np.float32)
    mel_np[:n_freqs, :n_mels] = mel_fb
    mel_p = jnp.asarray(mel_np)                            # f32 (NF_P, NMEL_P)

    grid = (B, NFR_P // frame_tile)
    kernel = functools.partial(_lms_kernel,
                               log_offset=np.float32(log_offset),
                               nf_p=NF_P)

    out = pl.pallas_call(
        kernel,
        out_shape=jax.ShapeDtypeStruct((B, NMEL_P, NFR_P), jnp.float32),
        grid_spec=pltpu.PrefetchScalarGridSpec(
            num_scalar_prefetch=0,
            grid=grid,
            in_specs=[
                pl.BlockSpec((None, frame_tile, n_fft),
                             lambda b, i: (b, i, 0)),
                pl.BlockSpec((n_fft, 2 * NF_P), lambda b, i: (0, 0)),
                pl.BlockSpec((NF_P, NMEL_P), lambda b, i: (0, 0)),
            ],
            out_specs=pl.BlockSpec((None, NMEL_P, frame_tile),
                                   lambda b, i: (b, 0, i)),
        ),
        compiler_params=pltpu.CompilerParams(
            dimension_semantics=("parallel", "parallel")),
    )(frames, dft_p, mel_p)

    # Already in torch output layout (B, n_mels, time); just strip padding.
    return out[:, :n_mels, :n_frames]


# ----------------------------------------------------------------------------
# Reference (plain JAX, unpadded) for sanity checks
# ----------------------------------------------------------------------------
def _reference(waveform, sample_rate=16000, win_length_s=0.025,
               hop_length_s=0.01, f_min=0.0, f_max=None, n_mels=128,
               log_offset=0.001, bf16_inputs=False):
    if f_max is None:
        f_max = sample_rate // 2
    win_length = int(np.round(sample_rate * win_length_s))
    n_fft = win_length
    hop = int(np.round(sample_rate * hop_length_s))
    n_freqs = n_fft // 2 + 1
    B, T = waveform.shape
    n_frames = 1 + (T - n_fft) // hop
    idx = np.arange(n_frames)[:, None] * hop + np.arange(n_fft)[None, :]
    frames = waveform[:, idx].astype(jnp.float32)          # (B, nF, n_fft)
    cos_m, sin_m = _windowed_dft_matrices(n_fft)
    mel_fb = jnp.asarray(
        _melscale_fbanks_slaney(n_freqs, f_min, f_max, n_mels, sample_rate))
    cos_j = jnp.asarray(cos_m)
    sin_j = jnp.asarray(sin_m)
    if bf16_inputs:  # match the kernel's bf16 rounding of the DFT inputs
        frames = frames.astype(jnp.bfloat16).astype(jnp.float32)
        cos_j = cos_j.astype(jnp.bfloat16).astype(jnp.float32)
        sin_j = sin_j.astype(jnp.bfloat16).astype(jnp.float32)
    hi = jax.lax.Precision.HIGHEST
    re = jnp.einsum("bfn,nk->bfk", frames, cos_j, precision=hi)
    im = jnp.einsum("bfn,nk->bfk", frames, sin_j, precision=hi)
    power = re * re + im * im
    mel = jnp.einsum("bfk,km->bfm", power, mel_fb, precision=hi)
    return jnp.transpose(jnp.log(mel + log_offset), (0, 2, 1))


if __name__ == "__main__":
    n_fft, hop = 400, 160
    key = jax.random.PRNGKey(0)
    k1, k2 = jax.random.split(key)

    # --- small test: B=2, 8 frames (single tile per batch row) ---
    B1, nF1 = 2, 8
    T1 = n_fft + (nF1 - 1) * hop               # 1520 samples (~95 ms)
    wav1 = jax.random.normal(k1, (B1, T1), dtype=jnp.float32)
    out1 = jax.block_until_ready(log_mel_spectrogram(wav1))
    assert out1.shape == (B1, 128, nF1), out1.shape
    # Tight check vs. a reference with the same bf16 input rounding.
    ref1_b = jax.block_until_ready(_reference(wav1, bf16_inputs=True))
    np.testing.assert_allclose(np.asarray(out1), np.asarray(ref1_b),
                               rtol=5e-2, atol=5e-2)
    # Loose check vs. the full-f32 reference (module semantics).
    ref1_f = jax.block_until_ready(_reference(wav1, bf16_inputs=False))
    np.testing.assert_allclose(np.asarray(out1), np.asarray(ref1_f),
                               rtol=1e-1, atol=1e-1)

    # --- multi-tile test: B=1, 300 frames -> exercises the >=2-grid-cell
    #     split, multiple frame tiles, strided output writes and padded tail ---
    B2, nF2 = 1, 300
    T2 = n_fft + (nF2 - 1) * hop                # 48240 samples (~3 s)
    wav2 = jax.random.normal(k2, (B2, T2), dtype=jnp.float32)
    out2 = jax.block_until_ready(log_mel_spectrogram(wav2))
    assert out2.shape == (B2, 128, nF2), out2.shape
    ref2_b = jax.block_until_ready(_reference(wav2, bf16_inputs=True))
    np.testing.assert_allclose(np.asarray(out2), np.asarray(ref2_b),
                               rtol=5e-2, atol=5e-2)

    print("KERNEL_OK")
</pallas_src>

<mosaic_0001>
module attributes {stable_mosaic.version = 11 : i64} {
  func.func @_lms_kernel(%arg0: i32, %arg1: i32, %arg2: memref<1x128x400xbf16, #tpu.memory_space<vmem>>, %arg3: memref<400x512xbf16, #tpu.memory_space<vmem>>, %arg4: memref<256x128xf32, #tpu.memory_space<vmem>>, %arg5: memref<1x128x128xf32, #tpu.memory_space<vmem>>) attributes {dimension_semantics = [#tpu.dimension_semantics<parallel>, #tpu.dimension_semantics<parallel>], iteration_bounds = array<i64: 2, 1>, scalar_prefetch = 0 : i64, scratch_operands = 0 : i64, tpu.core_type = #tpu.core_type<tc>, window_params = [{transform_indices = @transform_0, window_bounds = array<i64: 1, 128, 400>}, {pipeline_mode = #tpu.pipeline_mode<synchronous>, transform_indices = @transform_1, window_bounds = array<i64: 400, 512>}, {pipeline_mode = #tpu.pipeline_mode<synchronous>, transform_indices = @transform_2, window_bounds = array<i64: 256, 128>}, {transform_indices = @transform_3, window_bounds = array<i64: 1, 128, 128>}]} {
    %c0 = arith.constant 0 : index
    %c0_0 = arith.constant 0 : index
    %c0_1 = arith.constant 0 : index
    %0 = vector.load %arg2[%c0, %c0_0, %c0_1] : memref<1x128x400xbf16, #tpu.memory_space<vmem>>, vector<1x128x400xbf16>
    %1 = vector.shape_cast %0 : vector<1x128x400xbf16> to vector<128x400xbf16>
    %c0_2 = arith.constant 0 : index
    %c0_3 = arith.constant 0 : index
    %2 = vector.load %arg3[%c0_2, %c0_3] : memref<400x512xbf16, #tpu.memory_space<vmem>>, vector<400x512xbf16>
    %cst = arith.constant dense<0.000000e+00> : vector<128x512xf32>
    %3 = tpu.matmul %1, %2, %cst {dimension_numbers = #tpu.dot_dimension_numbers<[1], [0], [0], [1], [0, 0, 1, 1], [], []>} : vector<128x400xbf16>, vector<400x512xbf16>, vector<128x512xf32> -> vector<128x512xf32>
    %4 = vector.extract_strided_slice %3 {offsets = [0, 0], sizes = [128, 256], strides = [1, 1]} : vector<128x512xf32> to vector<128x256xf32>
    %5 = vector.extract_strided_slice %3 {offsets = [0, 256], sizes = [128, 256], strides = [1, 1]} : vector<128x512xf32> to vector<128x256xf32>
    %6 = arith.mulf %4, %4 : vector<128x256xf32>
    %7 = arith.mulf %5, %5 : vector<128x256xf32>
    %8 = arith.addf %6, %7 : vector<128x256xf32>
    %c0_4 = arith.constant 0 : index
    %c0_5 = arith.constant 0 : index
    %9 = vector.load %arg4[%c0_4, %c0_5] : memref<256x128xf32, #tpu.memory_space<vmem>>, vector<256x128xf32>
    %cst_6 = arith.constant dense<0.000000e+00> : vector<128x128xf32>
    %10 = tpu.matmul %8, %9, %cst_6 {dimension_numbers = #tpu.dot_dimension_numbers<[1], [0], [0], [1], [0, 0, 1, 1], [], []>} : vector<128x256xf32>, vector<256x128xf32>, vector<128x128xf32> -> vector<128x128xf32>
    %cst_7 = arith.constant 1.000000e-03 : f32
    %11 = vector.broadcast %cst_7 : f32 to vector<128x128xf32>
    %12 = arith.addf %10, %11 : vector<128x128xf32>
    %13 = math.log %12 : vector<128x128xf32>
    %14 = tpu.transpose %13, [1, 0] : vector<128x128xf32> -> vector<128x128xf32>
    %c0_8 = arith.constant 0 : index
    %c0_9 = arith.constant 0 : index
    %c0_10 = arith.constant 0 : index
    %15 = vector.load %arg5[%c0_8, %c0_9, %c0_10] : memref<1x128x128xf32, #tpu.memory_space<vmem>>, vector<1x128x128xf32>
    %16 = vector.shape_cast %15 : vector<1x128x128xf32> to vector<128x128xf32>
    %17 = vector.shape_cast %14 : vector<128x128xf32> to vector<1x128x128xf32>
    tpu.vector_store %arg5[%c0_8, %c0_9, %c0_10], %17 {strides = array<i32>} : memref<1x128x128xf32, #tpu.memory_space<vmem>>, vector<1x128x128xf32>,
    return
  }
  func.func @transform_0(%arg0: i32, %arg1: i32) -> (i32, i32, i32) {
    %c0_i32 = arith.constant 0 : i32
    %c0_i32_0 = arith.constant 0 : i32
    return %arg0, %arg1, %c0_i32 : i32, i32, i32
  }
  func.func @transform_1(%arg0: i32, %arg1: i32) -> (i32, i32) {
    %c0_i32 = arith.constant 0 : i32
    %c0_i32_0 = arith.constant 0 : i32
    %c0_i32_1 = arith.constant 0 : i32
    return %c0_i32, %c0_i32_0 : i32, i32
  }
  func.func @transform_2(%arg0: i32, %arg1: i32) -> (i32, i32) {
    %c0_i32 = arith.constant 0 : i32
    %c0_i32_0 = arith.constant 0 : i32
    %c0_i32_1 = arith.constant 0 : i32
    return %c0_i32, %c0_i32_0 : i32, i32
  }
  func.func @transform_3(%arg0: i32, %arg1: i32) -> (i32, i32, i32) {
    %c0_i32 = arith.constant 0 : i32
    %c0_i32_0 = arith.constant 0 : i32
    return %arg0, %c0_i32, %arg1 : i32, i32, i32
  }
}

</mosaic_0001>

<llo_original>
// kernel: tpu_custom_call.1
$region0: #{tpu_custom_call.1}
  #allocation0 [shape = 'u32[]', space=smem, size = 0x4, offset = 0x4, fixed_abs, tag = 'smem constant byte address 0x4 - core index']
  #allocation1 [shape = 'u32[144,128]{1,0:T(1,128)}', space=vmem, size = 0x12000, scoped, tag = 'internal scratch']
  %s0 = inlined_call_operand.vmem [shape: bf16[2,128,400], index: 0, kind: input, shape index: {}]
  %s1 = inlined_call_operand.vmem [shape: bf16[400,512], index: 1, kind: input, shape index: {}]
  %s2 = inlined_call_operand.hbm [shape: f32[256,128], index: 2, kind: input, shape index: {}]
  %s3 = inlined_call_operand.hbm [shape: f32[2,128,128], index: 3, kind: output, shape index: {}]
  %s4 = sld [smem:[#allocation0]]
  $region49: #{tpu_custom_call.1} parent=0
    _
  %s6 = ssub.s32 1, %s4
  %s7 = scalar_select 0, %s6, %s4
  $region1: #{tpu_custom_call.1} parent=0
    #allocation2 [shape = 'u8[131072]{0}', space=vmem, size = 0x20000, scoped, tag = 'input window, operand 2, single buffered']
    #allocation3 [shape = 's32[2]{0}', space=sflag, size = 0x8, scoped, tag = 'scoped memory for tpu_custom_call.1']
    #allocation4 [shape = 's32[2]{0}', space=sflag, size = 0x8, scoped, tag = 'scoped memory for tpu_custom_call.1']
    #allocation5 [shape = 'u8[131072]{0}', space=vmem, size = 0x20000, scoped, tag = 'output window, operand 0']
    %8 = vsyncpa [#allocation3], 0
    %9 = vsyncpa [#allocation4], 0
    %s10 = scalar_lea.sflag [#allocation4], 1
    %11 = vsyncpa %s10, 0
    loop: start=0, step=1, limit=4
    $region2: #{tpu_custom_call.1} parent=1 // loop_pre_header
      _
    $region3: #{tpu_custom_call.1} parent=1 // loop_header
      %s13 = sphi 0, %s17
      %p14 = scmp.ge.s32.totalorder %s13, 4
      %s20 = sphi 0, %s32
      %s21 = sphi 0, %s28
      %s22 = sphi 0, %s20
      %s23 = sphi 0, %s21
      %s24 = sphi 0, %s22
      %s25 = sphi 0, %s23
      %s37 = sphi 0, %s39
      %s40 = sphi 0, %s37
      %s41 = sphi 0, %s40
      %s57 = sphi 0, %s41
      %s61 = sphi 0, %s61
      %s63 = sphi 0, %s61
      %s64 = sphi 0, %s63
      %s78 = sphi 0, %s64
      %s82 = sphi 0, %s82
      %s84 = sphi 0, %s82
      %s85 = sphi 0, %s84
      %s99 = sphi 0, %s85
      %s107 = sphi 0, %s109
      %s110 = sphi 0, %s107
      %s111 = sphi 0, %s110
      %s127 = sphi 0, %s111
    $region4: #{tpu_custom_call.1} parent=1 // loop_header_branch
      %16 = sbr.rel (%p14) target = $region8
    $region5: #{tpu_custom_call.1} parent=1 // loop_body
      %s18 = ssub.s32 %s13, 1
      %s19 = ssub.s32 %s13, 2
      %s26 = sadd.s32 1, %s21
      %p27 = scmp.ge.s32.totalorder %s26, 1
      %s28 = scalar_select %p27, 0, %s26
      %s29 = sadd.s32 1, %s20
      %s30 = scalar_select %p27, %s29, %s20
      %p31 = scmp.ge.s32.totalorder %s30, 2
      %s32 = scalar_select %p31, 0, %s30
      %s33 = ssub.s32 %s20, %s32
      %s34 = ssub.s32 %s21, %s28
      %s35 = sor.u32 %s33, %s34
      %p36 = scmp.eq.s32.totalorder %s35, 0
      %s38 = sadd.s32 %s37, 1
      %s39 = scalar_select %p36, %s37, %s38
      %p42 = pneg %p36
      %p43 = scmp.eq.s32.totalorder %s13, 1
      %p44 = por %p42, %p43
      %p45 = scmp.ne.s32.totalorder %s37, %s40
      %p46 = scmp.eq.s32.totalorder %s13, 0
      %p47 = por %p45, %p46
      %p48 = scmp.ne.s32.totalorder %s37, %s40
      %p49 = scmp.eq.s32.totalorder %s18, 1
      %p50 = por %p48, %p49
      %p51 = scmp.ne.s32.totalorder %s40, %s41
      %p52 = scmp.eq.s32.totalorder %s18, 0
      %p53 = por %p51, %p52
      %p54 = scmp.ne.s32.totalorder %s40, %s41
      %p55 = scmp.eq.s32.totalorder %s19, 1
      %p56 = por %p54, %p55
      %p58 = scmp.ne.s32.totalorder %s41, %s57
      %p59 = scmp.eq.s32.totalorder %s19, 0
      %p60 = por %p58, %p59
      %s62 = sadd.s32 %s61, 1
      %p65 = scmp.eq.s32.totalorder %s13, 1
      %p66 = scmp.ne.s32.totalorder %s61, %s63
      %p67 = scmp.eq.s32.totalorder %s13, 0
      %p68 = por %p66, %p67
      %p69 = scmp.ne.s32.totalorder %s61, %s63
      %p70 = scmp.eq.s32.totalorder %s18, 1
      %p71 = por %p69, %p70
      %p72 = scmp.ne.s32.totalorder %s63, %s64
      %p73 = scmp.eq.s32.totalorder %s18, 0
      %p74 = por %p72, %p73
      %p75 = scmp.ne.s32.totalorder %s63, %s64
      %p76 = scmp.eq.s32.totalorder %s19, 1
      %p77 = por %p75, %p76
      %p79 = scmp.ne.s32.totalorder %s64, %s78
      %p80 = scmp.eq.s32.totalorder %s19, 0
      %p81 = por %p79, %p80
      %s83 = sadd.s32 %s82, 1
      %p86 = scmp.eq.s32.totalorder %s13, 1
      %p87 = scmp.ne.s32.totalorder %s82, %s84
      %p88 = scmp.eq.s32.totalorder %s13, 0
      %p89 = por %p87, %p88
      %p90 = scmp.ne.s32.totalorder %s82, %s84
      %p91 = scmp.eq.s32.totalorder %s18, 1
      %p92 = por %p90, %p91
      %p93 = scmp.ne.s32.totalorder %s84, %s85
      %p94 = scmp.eq.s32.totalorder %s18, 0
      %p95 = por %p93, %p94
      %p96 = scmp.ne.s32.totalorder %s84, %s85
      %p97 = scmp.eq.s32.totalorder %s19, 1
      %p98 = por %p96, %p97
      %p100 = scmp.ne.s32.totalorder %s85, %s99
      %p101 = scmp.eq.s32.totalorder %s19, 0
      %p102 = por %p100, %p101
      %s103 = ssub.s32 %s20, %s32
      %s104 = ssub.s32 %s21, %s28
      %s105 = sor.u32 %s103, %s104
      %p106 = scmp.eq.s32.totalorder %s105, 0
      %s108 = sadd.s32 %s107, 1
      %s109 = scalar_select %p106, %s107, %s108
      %p112 = pneg %p106
      %p113 = scmp.eq.s32.totalorder %s13, 1
      %p114 = por %p112, %p113
      %p115 = scmp.ne.s32.totalorder %s107, %s110
      %p116 = scmp.eq.s32.totalorder %s13, 0
      %p117 = por %p115, %p116
      %p118 = scmp.ne.s32.totalorder %s107, %s110
      %p119 = scmp.eq.s32.totalorder %s18, 1
      %p120 = por %p118, %p119
      %p121 = scmp.ne.s32.totalorder %s110, %s111
      %p122 = scmp.eq.s32.totalorder %s18, 0
      %p123 = por %p121, %p122
      %p124 = scmp.ne.s32.totalorder %s110, %s111
      %p125 = scmp.eq.s32.totalorder %s19, 1
      %p126 = por %p124, %p125
      %p128 = scmp.ne.s32.totalorder %s111, %s127
      %p129 = scmp.eq.s32.totalorder %s19, 0
      %p130 = por %p128, %p129
      %p131 = scmp.le.s32.totalorder 1, %s13
      %p132 = scmp.lt.s32.totalorder %s13, 3
      %p133 = pnand %p131, %p132
      %p134 = pneg %p133
      // Predicated region
      $region9: #{tpu_custom_call.1} parent=5 // pred_check
        _
      $region10: #{tpu_custom_call.1} parent=5 // pred_check_branch
        %136 = sbr.rel (%p133) target = $region12
      $region11: #{tpu_custom_call.1} parent=5 // pred_region
        %s137 = ssub.s32 %s13, 1
        // Predicated region
        $region13: #{tpu_custom_call.1} parent=11 // pred_check
          %p138 = pneg %p74
        $region14: #{tpu_custom_call.1} parent=11 // pred_check_branch
          %140 = sbr.rel (%p138) target = $region16
        $region15: #{tpu_custom_call.1} parent=11 // pred_region
          _
        $region16: #{tpu_custom_call.1} parent=11 // pred_fallthru
          _
        // Predicated region
        $region17: #{tpu_custom_call.1} parent=11 // pred_check
          %p141 = pneg %p95
        $region18: #{tpu_custom_call.1} parent=11 // pred_check_branch
          %143 = sbr.rel (%p141) target = $region20
        $region19: #{tpu_custom_call.1} parent=11 // pred_region
          %s145 = ssub.s32 4096, 4096
          %146 = vsyncadd [#allocation3], %s145
          %s147 = sshll.u32 [#allocation2], 4
          %s148 = int_to_ptr.vmem [resolvable:$true] %s147
          %153 = dma.hbm_to_vmem [thread:$0]  %s2, 4096, %s148, [#allocation3], 128, 128, 8
        $region20: #{tpu_custom_call.1} parent=11 // pred_fallthru
          _
      $region12: #{tpu_custom_call.1} parent=5 // pred_fallthru
        _
      %p154 = scmp.lt.s32.totalorder %s13, 2
      // Predicated region
      $region21: #{tpu_custom_call.1} parent=5 // pred_check
        %p155 = pneg %p154
      $region22: #{tpu_custom_call.1} parent=5 // pred_check_branch
        %157 = sbr.rel (%p155) target = $region24
      $region23: #{tpu_custom_call.1} parent=5 // pred_region
        // Predicated region
        $region25: #{tpu_custom_call.1} parent=23 // pred_check
          %p158 = pneg %p47
        $region26: #{tpu_custom_call.1} parent=23 // pred_check_branch
          %160 = sbr.rel (%p158) target = $region28
        $region27: #{tpu_custom_call.1} parent=23 // pred_region
          %s161 = smul.u32 16, %s21
          %p162 = scmp.lt.s32.totalorder %s20, 1
          %s163 = scalar_select %p162, %s20, 1
          %p164 = scmp.lt.s32.totalorder %s161, 15
          %s165 = scalar_select %p164, %s161, 15
          %s166 = smul.addr %s165, 4
          %s167 = smul.addr %s163, 64
          %s168 = sadd.s32 %s166, %s167
          %s169 = smul.addr %s168, 4
          %s170 = scalar_lea.vmem %s0, %s169
          %s171 = smul.u32 16, %s21
        $region28: #{tpu_custom_call.1} parent=23 // pred_fallthru
          _
      $region24: #{tpu_custom_call.1} parent=5 // pred_fallthru
        _
      %p172 = scmp.le.s32.totalorder 1, %s13
      %p173 = scmp.lt.s32.totalorder %s13, 3
      %p174 = pnand %p172, %p173
      %p175 = pneg %p174
      // Predicated region
      $region29: #{tpu_custom_call.1} parent=5 // pred_check
        _
      $region30: #{tpu_custom_call.1} parent=5 // pred_check_branch
        %177 = sbr.rel (%p174) target = $region32
      $region31: #{tpu_custom_call.1} parent=5 // pred_region
        %s178 = ssub.s32 %s13, 1
        // Predicated region
        $region33: #{tpu_custom_call.1} parent=31 // pred_check
          %p179 = pneg %p95
        $region34: #{tpu_custom_call.1} parent=31 // pred_check_branch
          %181 = sbr.rel (%p179) target = $region36
        $region35: #{tpu_custom_call.1} parent=31 // pred_region
          %182 = dma.done [#allocation3], 4096
        $region36: #{tpu_custom_call.1} parent=31 // pred_fallthru
          _
        %s183 = smul.u32 16, %s23
        %p184 = scmp.lt.s32.totalorder %s22, 1
        %s185 = scalar_select %p184, %s22, 1
        %p186 = scmp.lt.s32.totalorder %s183, 15
        %s187 = scalar_select %p186, %s183, 15
        %s188 = smul.addr %s187, 4
        %s189 = smul.addr %s185, 64
        %s190 = sadd.s32 %s188, %s189
        %s191 = smul.addr %s190, 4
        %s192 = scalar_lea.vmem %s0, %s191
        %p193 = pneg %p53
        %p194 = pneg %p50
        %p195 = pneg %p74
        %p196 = pneg %p71
        %p197 = pneg %p95
        %p198 = pneg %p92
        %p199 = pneg %p123
        %p200 = pneg %p120
        %s201 = sand.u32 %s110, 1
        %s202 = scalar_lea.sflag [#allocation4], %s201
        %s203 = sand.u32 %s110, 1
        %s204 = smul.addr %s203, 128
        %s205 = scalar_lea.vmem [#allocation5], %s204
        %s206 = smul.u32 16, %s23
        %p207 = scmp.lt.s32.totalorder %s22, 1
        %s208 = scalar_select %p207, %s22, 1
        %p209 = scmp.lt.s32.totalorder %s206, 15
        %s210 = scalar_select %p209, %s206, 15
        %s211 = smul.addr %s210, 4
        %s212 = smul.addr %s208, 64
        %s213 = sadd.s32 %s211, %s212
        %s214 = smul.addr %s213, 4
        %s215 = scalar_lea.vmem %s0, %s214
        %s216 = smul.u32 16, %s23
        %v218 = vld [vmem:[%s215] sm:$0xff]
        %v219 = vld [vmem:[%s215 + $0x8] sm:$0xff]
        %v220 = vld [vmem:[%s215 + $0x10] sm:$0xff]
        %v221 = vld [vmem:[%s215 + $0x18] sm:$0xff]
        %v222 = vld [vmem:[%s215 + $0x20] sm:$0xff]
        %v223 = vld [vmem:[%s215 + $0x28] sm:$0xff]
        %v224 = vld [vmem:[%s215 + $0x30] sm:$0xff]
        %v225 = vld [vmem:[%s215 + $0x38] sm:$0xff]
        %v226 = vld [vmem:[%s215 + $0x40] sm:$0xff]
        %v227 = vld [vmem:[%s215 + $0x48] sm:$0xff]
        %v228 = vld [vmem:[%s215 + $0x50] sm:$0xff]
        %v229 = vld [vmem:[%s215 + $0x58] sm:$0xff]
        %v230 = vld [vmem:[%s215 + $0x60] sm:$0xff]
        %v231 = vld [vmem:[%s215 + $0x68] sm:$0xff]
        %v232 = vld [vmem:[%s215 + $0x70] sm:$0xff]
        %v233 = vld [vmem:[%s215 + $0x78] sm:$0xff]
        %v234 = vld [vmem:[%s215 + $0x80] sm:$0xff]
        %v235 = vld [vmem:[%s215 + $0x88] sm:$0xff]
        %v236 = vld [vmem:[%s215 + $0x90] sm:$0xff]
        %v237 = vld [vmem:[%s215 + $0x98] sm:$0xff]
        %v238 = vld [vmem:[%s215 + $0xa0] sm:$0xff]
        %v239 = vld [vmem:[%s215 + $0xa8] sm:$0xff]
        %v240 = vld [vmem:[%s215 + $0xb0] sm:$0xff]
        %v241 = vld [vmem:[%s215 + $0xb8] sm:$0xff]
        %v242 = vld [vmem:[%s215 + $0xc0] sm:$0xff]
        %v243 = vld [vmem:[%s215 + $0xc8] sm:$0xff]
        %v244 = vld [vmem:[%s215 + $0xd0] sm:$0xff]
        %v245 = vld [vmem:[%s215 + $0xd8] sm:$0xff]
        %v246 = vld [vmem:[%s215 + $0xe0] sm:$0xff]
        %v247 = vld [vmem:[%s215 + $0xe8] sm:$0xff]
        %v248 = vld [vmem:[%s215 + $0xf0] sm:$0xff]
        %v249 = vld [vmem:[%s215 + $0xf8] sm:$0xff]
        %v250 = vld [vmem:[%s1] sm:$0xff]
        %v251 = vld [vmem:[%s1 + $0x8] sm:$0xff]
        %v252 = vld [vmem:[%s1 + $0x10] sm:$0xff]
        %v253 = vld [vmem:[%s1 + $0x18] sm:$0xff]
        %v254 = vld [vmem:[%s1 + $0x20] sm:$0xff]
        %v255 = vld [vmem:[%s1 + $0x28] sm:$0xff]
        %v256 = vld [vmem:[%s1 + $0x30] sm:$0xff]
        %v257 = vld [vmem:[%s1 + $0x38] sm:$0xff]
        %v258 = vld [vmem:[%s1 + $0x40] sm:$0xff]
        %v259 = vld [vmem:[%s1 + $0x48] sm:$0xff]
        %v260 = vld [vmem:[%s1 + $0x50] sm:$0xff]
        %v261 = vld [vmem:[%s1 + $0x58] sm:$0xff]
        %v262 = vld [vmem:[%s1 + $0x60] sm:$0xff]
        %v263 = vld [vmem:[%s1 + $0x68] sm:$0xff]
        %v264 = vld [vmem:[%s1 + $0x70] sm:$0xff]
        %v265 = vld [vmem:[%s1 + $0x78] sm:$0xff]
        %v266 = vld [vmem:[%s1 + $0x80] sm:$0xff]
        %v267 = vld [vmem:[%s1 + $0x88] sm:$0xff]
        %v268 = vld [vmem:[%s1 + $0x90] sm:$0xff]
        %v269 = vld [vmem:[%s1 + $0x98] sm:$0xff]
        %v270 = vld [vmem:[%s1 + $0xa0] sm:$0xff]
        %v271 = vld [vmem:[%s1 + $0xa8] sm:$0xff]
        %v272 = vld [vmem:[%s1 + $0xb0] sm:$0xff]
        %v273 = vld [vmem:[%s1 + $0xb8] sm:$0xff]
        %v274 = vld [vmem:[%s1 + $0xc0] sm:$0xff]
        %v275 = vld [vmem:[%s1 + $0xc8] sm:$0xff]
        %v276 = vld [vmem:[%s1 + $0xd0] sm:$0xff]
        %v277 = vld [vmem:[%s1 + $0xd8] sm:$0xff]
        %v278 = vld [vmem:[%s1 + $0xe0] sm:$0xff]
        %v279 = vld [vmem:[%s1 + $0xe8] sm:$0xff]
        %v280 = vld [vmem:[%s1 + $0xf0] sm:$0xff]
        %v281 = vld [vmem:[%s1 + $0xf8] sm:$0xff]
        %v282 = vld [vmem:[%s1 + $0x100] sm:$0xff]
        %v283 = vld [vmem:[%s1 + $0x108] sm:$0xff]
        %v284 = vld [vmem:[%s1 + $0x110] sm:$0xff]
        %v285 = vld [vmem:[%s1 + $0x118] sm:$0xff]
        %v286 = vld [vmem:[%s1 + $0x120] sm:$0xff]
        %v287 = vld [vmem:[%s1 + $0x128] sm:$0xff]
        %v288 = vld [vmem:[%s1 + $0x130] sm:$0xff]
        %v289 = vld [vmem:[%s1 + $0x138] sm:$0xff]
        %v290 = vld [vmem:[%s1 + $0x140] sm:$0xff]
        %v291 = vld [vmem:[%s1 + $0x148] sm:$0xff]
        %v292 = vld [vmem:[%s1 + $0x150] sm:$0xff]
        %v293 = vld [vmem:[%s1 + $0x158] sm:$0xff]
        %v294 = vld [vmem:[%s1 + $0x160] sm:$0xff]
        %v295 = vld [vmem:[%s1 + $0x168] sm:$0xff]
        %v296 = vld [vmem:[%s1 + $0x170] sm:$0xff]
        %v297 = vld [vmem:[%s1 + $0x178] sm:$0xff]
        %v298 = vld [vmem:[%s1 + $0x180] sm:$0xff]
        %v299 = vld [vmem:[%s1 + $0x188] sm:$0xff]
        %v300 = vld [vmem:[%s1 + $0x190] sm:$0xff]
        %v301 = vld [vmem:[%s1 + $0x198] sm:$0xff]
        %v302 = vld [vmem:[%s1 + $0x1a0] sm:$0xff]
        %v303 = vld [vmem:[%s1 + $0x1a8] sm:$0xff]
        %v304 = vld [vmem:[%s1 + $0x1b0] sm:$0xff]
        %v305 = vld [vmem:[%s1 + $0x1b8] sm:$0xff]
        %v306 = vld [vmem:[%s1 + $0x1c0] sm:$0xff]
        %v307 = vld [vmem:[%s1 + $0x1c8] sm:$0xff]
        %v308 = vld [vmem:[%s1 + $0x1d0] sm:$0xff]
        %v309 = vld [vmem:[%s1 + $0x1d8] sm:$0xff]
        %v310 = vld [vmem:[%s1 + $0x1e0] sm:$0xff]
        %v311 = vld [vmem:[%s1 + $0x1e8] sm:$0xff]
        %v312 = vld [vmem:[%s1 + $0x1f0] sm:$0xff]
        %v313 = vld [vmem:[%s1 + $0x1f8] sm:$0xff]
        %v314 = vld [vmem:[%s1 + $0x200] sm:$0xff]
        %v315 = vld [vmem:[%s1 + $0x208] sm:$0xff]
        %v316 = vld [vmem:[%s1 + $0x210] sm:$0xff]
        %v317 = vld [vmem:[%s1 + $0x218] sm:$0xff]
        %v318 = vld [vmem:[%s1 + $0x220] sm:$0xff]
        %v319 = vld [vmem:[%s1 + $0x228] sm:$0xff]
        %v320 = vld [vmem:[%s1 + $0x230] sm:$0xff]
        %v321 = vld [vmem:[%s1 + $0x238] sm:$0xff]
        %v322 = vld [vmem:[%s1 + $0x240] sm:$0xff]
        %v323 = vld [vmem:[%s1 + $0x248] sm:$0xff]
        %v324 = vld [vmem:[%s1 + $0x250] sm:$0xff]
        %v325 = vld [vmem:[%s1 + $0x258] sm:$0xff]
        %v326 = vld [vmem:[%s1 + $0x260] sm:$0xff]
        %v327 = vld [vmem:[%s1 + $0x268] sm:$0xff]
        %v328 = vld [vmem:[%s1 + $0x270] sm:$0xff]
        %v329 = vld [vmem:[%s1 + $0x278] sm:$0xff]
        %v330 = vld [vmem:[%s1 + $0x280] sm:$0xff]
        %v331 = vld [vmem:[%s1 + $0x288] sm:$0xff]
        %v332 = vld [vmem:[%s1 + $0x290] sm:$0xff]
        %v333 = vld [vmem:[%s1 + $0x298] sm:$0xff]
        %v334 = vld [vmem:[%s1 + $0x2a0] sm:$0xff]
        %v335 = vld [vmem:[%s1 + $0x2a8] sm:$0xff]
        %v336 = vld [vmem:[%s1 + $0x2b0] sm:$0xff]
        %v337 = vld [vmem:[%s1 + $0x2b8] sm:$0xff]
        %v338 = vld [vmem:[%s1 + $0x2c0] sm:$0xff]
        %v339 = vld [vmem:[%s1 + $0x2c8] sm:$0xff]
        %v340 = vld [vmem:[%s1 + $0x2d0] sm:$0xff]
        %v341 = vld [vmem:[%s1 + $0x2d8] sm:$0xff]
        %v342 = vld [vmem:[%s1 + $0x2e0] sm:$0xff]
        %v343 = vld [vmem:[%s1 + $0x2e8] sm:$0xff]
        %v344 = vld [vmem:[%s1 + $0x2f0] sm:$0xff]
        %v345 = vld [vmem:[%s1 + $0x2f8] sm:$0xff]
        %v346 = vld [vmem:[%s1 + $0x300] sm:$0xff]
        %v347 = vld [vmem:[%s1 + $0x308] sm:$0xff]
        %v348 = vld [vmem:[%s1 + $0x310] sm:$0xff]
        %v349 = vld [vmem:[%s1 + $0x318] sm:$0xff]
        %v382 = vunpack.c.l.b16 %v218
        %v383 = vunpack.c.h.b16 %v218
        %v384 = vunpack.c.l.b16 %v219
        %v385 = vunpack.c.h.b16 %v219
        %v386 = vunpack.c.l.b16 %v220
        %v387 = vunpack.c.h.b16 %v220
        %v388 = vunpack.c.l.b16 %v221
        %v389 = vunpack.c.h.b16 %v221
        %v390 = vunpack.c.l.b16 %v222
        %v391 = vunpack.c.h.b16 %v222
        %v392 = vunpack.c.l.b16 %v223
        %v393 = vunpack.c.h.b16 %v223
        %v394 = vunpack.c.l.b16 %v224
        %v395 = vunpack.c.h.b16 %v224
        %v396 = vunpack.c.l.b16 %v225
        %v397 = vunpack.c.h.b16 %v225
        %v398 = vunpack.c.l.b16 %v226
        %v399 = vunpack.c.h.b16 %v226
        %v400 = vunpack.c.l.b16 %v227
        %v401 = vunpack.c.h.b16 %v227
        %v402 = vunpack.c.l.b16 %v228
        %v403 = vunpack.c.h.b16 %v228
        %v404 = vunpack.c.l.b16 %v229
        %v405 = vunpack.c.h.b16 %v229
        %v406 = vunpack.c.l.b16 %v230
        %v407 = vunpack.c.h.b16 %v230
        %v408 = vunpack.c.l.b16 %v231
        %v409 = vunpack.c.h.b16 %v231
        %v410 = vunpack.c.l.b16 %v232
        %v411 = vunpack.c.h.b16 %v232
        %v412 = vunpack.c.l.b16 %v233
        %v413 = vunpack.c.h.b16 %v233
        %v414 = vunpack.c.l.b16 %v234
        %v415 = vunpack.c.h.b16 %v234
        %v416 = vunpack.c.l.b16 %v235
        %v417 = vunpack.c.h.b16 %v235
        %v418 = vunpack.c.l.b16 %v236
        %v419 = vunpack.c.h.b16 %v236
        %v420 = vunpack.c.l.b16 %v237
        %v421 = vunpack.c.h.b16 %v237
        %v422 = vunpack.c.l.b16 %v238
        %v423 = vunpack.c.h.b16 %v238
        %v424 = vunpack.c.l.b16 %v239
        %v425 = vunpack.c.h.b16 %v239
        %v426 = vunpack.c.l.b16 %v240
        %v427 = vunpack.c.h.b16 %v240
        %v428 = vunpack.c.l.b16 %v241
        %v429 = vunpack.c.h.b16 %v241
        %v430 = vunpack.c.l.b16 %v242
        %v431 = vunpack.c.h.b16 %v242
        %v432 = vunpack.c.l.b16 %v243
        %v433 = vunpack.c.h.b16 %v243
        %v434 = vunpack.c.l.b16 %v244
        %v435 = vunpack.c.h.b16 %v244
        %v436 = vunpack.c.l.b16 %v245
        %v437 = vunpack.c.h.b16 %v245
        %v438 = vunpack.c.l.b16 %v246
        %v439 = vunpack.c.h.b16 %v246
        %v440 = vunpack.c.l.b16 %v247
        %v441 = vunpack.c.h.b16 %v247
        %v442 = vunpack.c.l.b16 %v248
        %v443 = vunpack.c.h.b16 %v248
        %v444 = vunpack.c.l.b16 %v249
        %v445 = vunpack.c.h.b16 %v249
        %v446 = vpack.c.b16 %v386, %v382
        %v447 = vpack.c.b16 %v387, %v383
        %v448 = vpack.c.b16 %v388, %v384
        %v449 = vpack.c.b16 %v389, %v385
        %v450 = vpack.c.b16 %v394, %v390
        %v451 = vpack.c.b16 %v395, %v391
        %v452 = vpack.c.b16 %v396, %v392
        %v453 = vpack.c.b16 %v397, %v393
        %v454 = vpack.c.b16 %v402, %v398
        %v455 = vpack.c.b16 %v403, %v399
        %v456 = vpack.c.b16 %v404, %v400
        %v457 = vpack.c.b16 %v405, %v401
        %v458 = vpack.c.b16 %v410, %v406
        %v459 = vpack.c.b16 %v411, %v407
        %v460 = vpack.c.b16 %v412, %v408
        %v461 = vpack.c.b16 %v413, %v409
        %v462 = vpack.c.b16 %v418, %v414
        %v463 = vpack.c.b16 %v419, %v415
        %v464 = vpack.c.b16 %v420, %v416
        %v465 = vpack.c.b16 %v421, %v417
        %v466 = vpack.c.b16 %v426, %v422
        %v467 = vpack.c.b16 %v427, %v423
        %v468 = vpack.c.b16 %v428, %v424
        %v469 = vpack.c.b16 %v429, %v425
        %v470 = vpack.c.b16 %v434, %v430
        %v471 = vpack.c.b16 %v435, %v431
        %v472 = vpack.c.b16 %v436, %v432
        %v473 = vpack.c.b16 %v437, %v433
        %v474 = vpack.c.b16 %v442, %v438
        %v475 = vpack.c.b16 %v443, %v439
        %v476 = vpack.c.b16 %v444, %v440
        %v477 = vpack.c.b16 %v445, %v441
        %v602 = vunpack.c.l.b16 %v250
        %v603 = vunpack.c.h.b16 %v250
        %v604 = vunpack.c.l.b16 %v251
        %v605 = vunpack.c.h.b16 %v251
        %v606 = vunpack.c.l.b16 %v252
        %v607 = vunpack.c.h.b16 %v252
        %v608 = vunpack.c.l.b16 %v253
        %v609 = vunpack.c.h.b16 %v253
        %v610 = vunpack.c.l.b16 %v254
        %v611 = vunpack.c.h.b16 %v254
        %v612 = vunpack.c.l.b16 %v255
        %v613 = vunpack.c.h.b16 %v255
        %v614 = vunpack.c.l.b16 %v256
        %v615 = vunpack.c.h.b16 %v256
        %v616 = vunpack.c.l.b16 %v257
        %v617 = vunpack.c.h.b16 %v257
        %v618 = vunpack.c.l.b16 %v258
        %v619 = vunpack.c.h.b16 %v258
        %v620 = vunpack.c.l.b16 %v259
        %v621 = vunpack.c.h.b16 %v259
        %v622 = vunpack.c.l.b16 %v260
        %v623 = vunpack.c.h.b16 %v260
        %v624 = vunpack.c.l.b16 %v261
        %v625 = vunpack.c.h.b16 %v261
        %v626 = vunpack.c.l.b16 %v262
        %v627 = vunpack.c.h.b16 %v262
        %v628 = vunpack.c.l.b16 %v263
        %v629 = vunpack.c.h.b16 %v263
        %v630 = vunpack.c.l.b16 %v264
        %v631 = vunpack.c.h.b16 %v264
        %v632 = vunpack.c.l.b16 %v265
        %v633 = vunpack.c.h.b16 %v265
        %v634 = vunpack.c.l.b16 %v266
        %v635 = vunpack.c.h.b16 %v266
        %v636 = vunpack.c.l.b16 %v267
        %v637 = vunpack.c.h.b16 %v267
        %v638 = vunpack.c.l.b16 %v268
        %v639 = vunpack.c.h.b16 %v268
        %v640 = vunpack.c.l.b16 %v269
        %v641 = vunpack.c.h.b16 %v269
        %v642 = vunpack.c.l.b16 %v270
        %v643 = vunpack.c.h.b16 %v270
        %v644 = vunpack.c.l.b16 %v271
        %v645 = vunpack.c.h.b16 %v271
        %v646 = vunpack.c.l.b16 %v272
        %v647 = vunpack.c.h.b16 %v272
        %v648 = vunpack.c.l.b16 %v273
        %v649 = vunpack.c.h.b16 %v273
        %v650 = vunpack.c.l.b16 %v274
        %v651 = vunpack.c.h.b16 %v274
        %v652 = vunpack.c.l.b16 %v275
        %v653 = vunpack.c.h.b16 %v275
        %v654 = vunpack.c.l.b16 %v276
        %v655 = vunpack.c.h.b16 %v276
        %v656 = vunpack.c.l.b16 %v277
        %v657 = vunpack.c.h.b16 %v277
        %v658 = vunpack.c.l.b16 %v278
        %v659 = vunpack.c.h.b16 %v278
        %v660 = vunpack.c.l.b16 %v279
        %v661 = vunpack.c.h.b16 %v279
        %v662 = vunpack.c.l.b16 %v280
        %v663 = vunpack.c.h.b16 %v280
        %v664 = vunpack.c.l.b16 %v281
        %v665 = vunpack.c.h.b16 %v281
        %v666 = vunpack.c.l.b16 %v282
        %v667 = vunpack.c.h.b16 %v282
        %v668 = vunpack.c.l.b16 %v283
        %v669 = vunpack.c.h.b16 %v283
        %v670 = vunpack.c.l.b16 %v284
        %v671 = vunpack.c.h.b16 %v284
        %v672 = vunpack.c.l.b16 %v285
        %v673 = vunpack.c.h.b16 %v285
        %v674 = vunpack.c.l.b16 %v286
        %v675 = vunpack.c.h.b16 %v286
        %v676 = vunpack.c.l.b16 %v287
        %v677 = vunpack.c.h.b16 %v287
        %v678 = vunpack.c.l.b16 %v288
        %v679 = vunpack.c.h.b16 %v288
        %v680 = vunpack.c.l.b16 %v289
        %v681 = vunpack.c.h.b16 %v289
        %v682 = vunpack.c.l.b16 %v290
        %v683 = vunpack.c.h.b16 %v290
        %v684 = vunpack.c.l.b16 %v291
        %v685 = vunpack.c.h.b16 %v291
        %v686 = vunpack.c.l.b16 %v292
        %v687 = vunpack.c.h.b16 %v292
        %v688 = vunpack.c.l.b16 %v293
        %v689 = vunpack.c.h.b16 %v293
        %v690 = vunpack.c.l.b16 %v294
        %v691 = vunpack.c.h.b16 %v294
        %v692 = vunpack.c.l.b16 %v295
        %v693 = vunpack.c.h.b16 %v295
        %v694 = vunpack.c.l.b16 %v296
        %v695 = vunpack.c.h.b16 %v296
        %v696 = vunpack.c.l.b16 %v297
        %v697 = vunpack.c.h.b16 %v297
        %v698 = vunpack.c.l.b16 %v298
        %v699 = vunpack.c.h.b16 %v298
        %v700 = vunpack.c.l.b16 %v299
        %v701 = vunpack.c.h.b16 %v299
        %v702 = vunpack.c.l.b16 %v300
        %v703 = vunpack.c.h.b16 %v300
        %v704 = vunpack.c.l.b16 %v301
        %v705 = vunpack.c.h.b16 %v301
        %v706 = vunpack.c.l.b16 %v302
        %v707 = vunpack.c.h.b16 %v302
        %v708 = vunpack.c.l.b16 %v303
        %v709 = vunpack.c.h.b16 %v303
        %v710 = vunpack.c.l.b16 %v304
        %v711 = vunpack.c.h.b16 %v304
        %v712 = vunpack.c.l.b16 %v305
        %v713 = vunpack.c.h.b16 %v305
        %v714 = vunpack.c.l.b16 %v306
        %v715 = vunpack.c.h.b16 %v306
        %v716 = vunpack.c.l.b16 %v307
        %v717 = vunpack.c.h.b16 %v307
        %v718 = vunpack.c.l.b16 %v308
        %v719 = vunpack.c.h.b16 %v308
        %v720 = vunpack.c.l.b16 %v309
        %v721 = vunpack.c.h.b16 %v309
        %v722 = vunpack.c.l.b16 %v310
        %v723 = vunpack.c.h.b16 %v310
        %v724 = vunpack.c.l.b16 %v311
        %v725 = vunpack.c.h.b16 %v311
        %v726 = vunpack.c.l.b16 %v312
        %v727 = vunpack.c.h.b16 %v312
        %v728 = vunpack.c.l.b16 %v313
        %v729 = vunpack.c.h.b16 %v313
        %v730 = vunpack.c.l.b16 %v314
        %v731 = vunpack.c.h.b16 %v314
        %v732 = vunpack.c.l.b16 %v315
        %v733 = vunpack.c.h.b16 %v315
        %v734 = vunpack.c.l.b16 %v316
        %v735 = vunpack.c.h.b16 %v316
        %v736 = vunpack.c.l.b16 %v317
        %v737 = vunpack.c.h.b16 %v317
        %v738 = vunpack.c.l.b16 %v318
        %v739 = vunpack.c.h.b16 %v318
        %v740 = vunpack.c.l.b16 %v319
        %v741 = vunpack.c.h.b16 %v319
        %v742 = vunpack.c.l.b16 %v320
        %v743 = vunpack.c.h.b16 %v320
        %v744 = vunpack.c.l.b16 %v321
        %v745 = vunpack.c.h.b16 %v321
        %v746 = vunpack.c.l.b16 %v322
        %v747 = vunpack.c.h.b16 %v322
        %v748 = vunpack.c.l.b16 %v323
        %v749 = vunpack.c.h.b16 %v323
        %v750 = vunpack.c.l.b16 %v324
        %v751 = vunpack.c.h.b16 %v324
        %v752 = vunpack.c.l.b16 %v325
        %v753 = vunpack.c.h.b16 %v325
        %v754 = vunpack.c.l.b16 %v326
        %v755 = vunpack.c.h.b16 %v326
        %v756 = vunpack.c.l.b16 %v327
        %v757 = vunpack.c.h.b16 %v327
        %v758 = vunpack.c.l.b16 %v328
        %v759 = vunpack.c.h.b16 %v328
        %v760 = vunpack.c.l.b16 %v329
        %v761 = vunpack.c.h.b16 %v329
        %v762 = vunpack.c.l.b16 %v330
        %v763 = vunpack.c.h.b16 %v330
        %v764 = vunpack.c.l.b16 %v331
        %v765 = vunpack.c.h.b16 %v331
        %v766 = vunpack.c.l.b16 %v332
        %v767 = vunpack.c.h.b16 %v332
        %v768 = vunpack.c.l.b16 %v333
        %v769 = vunpack.c.h.b16 %v333
        %v770 = vunpack.c.l.b16 %v334
        %v771 = vunpack.c.h.b16 %v334
        %v772 = vunpack.c.l.b16 %v335
        %v773 = vunpack.c.h.b16 %v335
        %v774 = vunpack.c.l.b16 %v336
        %v775 = vunpack.c.h.b16 %v336
        %v776 = vunpack.c.l.b16 %v337
        %v777 = vunpack.c.h.b16 %v337
        %v778 = vunpack.c.l.b16 %v338
        %v779 = vunpack.c.h.b16 %v338
        %v780 = vunpack.c.l.b16 %v339
        %v781 = vunpack.c.h.b16 %v339
        %v782 = vunpack.c.l.b16 %v340
        %v783 = vunpack.c.h.b16 %v340
        %v784 = vunpack.c.l.b16 %v341
        %v785 = vunpack.c.h.b16 %v341
        %v786 = vunpack.c.l.b16 %v342
        %v787 = vunpack.c.h.b16 %v342
        %v788 = vunpack.c.l.b16 %v343
        %v789 = vunpack.c.h.b16 %v343
        %v790 = vunpack.c.l.b16 %v344
        %v791 = vunpack.c.h.b16 %v344
        %v792 = vunpack.c.l.b16 %v345
        %v793 = vunpack.c.h.b16 %v345
        %v794 = vunpack.c.l.b16 %v346
        %v795 = vunpack.c.h.b16 %v346
        %v796 = vunpack.c.l.b16 %v347
        %v797 = vunpack.c.h.b16 %v347
        %v798 = vunpack.c.l.b16 %v348
        %v799 = vunpack.c.h.b16 %v348
        %v800 = vunpack.c.l.b16 %v349
        %v801 = vunpack.c.h.b16 %v349
        %v802 = vpack.c.b16 %v606, %v602
        %v803 = vpack.c.b16 %v607, %v603
        %v804 = vpack.c.b16 %v608, %v604
        %v805 = vpack.c.b16 %v609, %v605
        %v806 = vpack.c.b16 %v614, %v610
        %v807 = vpack.c.b16 %v615, %v611
        %v808 = vpack.c.b16 %v616, %v612
        %v809 = vpack.c.b16 %v617, %v613
        %v810 = vpack.c.b16 %v622, %v618
        %v811 = vpack.c.b16 %v623, %v619
        %v812 = vpack.c.b16 %v624, %v620
        %v813 = vpack.c.b16 %v625, %v621
        %v814 = vpack.c.b16 %v630, %v626
        %v815 = vpack.c.b16 %v631, %v627
        %v816 = vpack.c.b16 %v632, %v628
        %v817 = vpack.c.b16 %v633, %v629
        %v818 = vpack.c.b16 %v638, %v634
        %v819 = vpack.c.b16 %v639, %v635
        %v820 = vpack.c.b16 %v640, %v636
        %v821 = vpack.c.b16 %v641, %v637
        %v822 = vpack.c.b16 %v646, %v642
        %v823 = vpack.c.b16 %v647, %v643
        %v824 = vpack.c.b16 %v648, %v644
        %v825 = vpack.c.b16 %v649, %v645
        %v826 = vpack.c.b16 %v654, %v650
        %v827 = vpack.c.b16 %v655, %v651
        %v828 = vpack.c.b16 %v656, %v652
        %v829 = vpack.c.b16 %v657, %v653
        %v830 = vpack.c.b16 %v662, %v658
        %v831 = vpack.c.b16 %v663, %v659
        %v832 = vpack.c.b16 %v664, %v660
        %v833 = vpack.c.b16 %v665, %v661
        %v834 = vpack.c.b16 %v670, %v666
        %v835 = vpack.c.b16 %v671, %v667
        %v836 = vpack.c.b16 %v672, %v668
        %v837 = vpack.c.b16 %v673, %v669
        %v838 = vpack.c.b16 %v678, %v674
        %v839 = vpack.c.b16 %v679, %v675
        %v840 = vpack.c.b16 %v680, %v676
        %v841 = vpack.c.b16 %v681, %v677
        %v842 = vpack.c.b16 %v686, %v682
        %v843 = vpack.c.b16 %v687, %v683
        %v844 = vpack.c.b16 %v688, %v684
        %v845 = vpack.c.b16 %v689, %v685
        %v846 = vpack.c.b16 %v694, %v690
        %v847 = vpack.c.b16 %v695, %v691
        %v848 = vpack.c.b16 %v696, %v692
        %v849 = vpack.c.b16 %v697, %v693
        %v850 = vpack.c.b16 %v702, %v698
        %v851 = vpack.c.b16 %v703, %v699
        %v852 = vpack.c.b16 %v704, %v700
        %v853 = vpack.c.b16 %v705, %v701
        %v854 = vpack.c.b16 %v710, %v706
        %v855 = vpack.c.b16 %v711, %v707
        %v856 = vpack.c.b16 %v712, %v708
        %v857 = vpack.c.b16 %v713, %v709
        %v858 = vpack.c.b16 %v718, %v714
        %v859 = vpack.c.b16 %v719, %v715
        %v860 = vpack.c.b16 %v720, %v716
        %v861 = vpack.c.b16 %v721, %v717
        %v862 = vpack.c.b16 %v726, %v722
        %v863 = vpack.c.b16 %v727, %v723
        %v864 = vpack.c.b16 %v728, %v724
        %v865 = vpack.c.b16 %v729, %v725
        %v866 = vpack.c.b16 %v734, %v730
        %v867 = vpack.c.b16 %v735, %v731
        %v868 = vpack.c.b16 %v736, %v732
        %v869 = vpack.c.b16 %v737, %v733
        %v870 = vpack.c.b16 %v742, %v738
        %v871 = vpack.c.b16 %v743, %v739
        %v872 = vpack.c.b16 %v744, %v740
        %v873 = vpack.c.b16 %v745, %v741
        %v874 = vpack.c.b16 %v750, %v746
        %v875 = vpack.c.b16 %v751, %v747
        %v876 = vpack.c.b16 %v752, %v748
        %v877 = vpack.c.b16 %v753, %v749
        %v878 = vpack.c.b16 %v758, %v754
        %v879 = vpack.c.b16 %v759, %v755
        %v880 = vpack.c.b16 %v760, %v756
        %v881 = vpack.c.b16 %v761, %v757
        %v882 = vpack.c.b16 %v766, %v762
        %v883 = vpack.c.b16 %v767, %v763
        %v884 = vpack.c.b16 %v768, %v764
        %v885 = vpack.c.b16 %v769, %v765
        %v886 = vpack.c.b16 %v774, %v770
        %v887 = vpack.c.b16 %v775, %v771
        %v888 = vpack.c.b16 %v776, %v772
        %v889 = vpack.c.b16 %v777, %v773
        %v890 = vpack.c.b16 %v782, %v778
        %v891 = vpack.c.b16 %v783, %v779
        %v892 = vpack.c.b16 %v784, %v780
        %v893 = vpack.c.b16 %v785, %v781
        %v894 = vpack.c.b16 %v790, %v786
        %v895 = vpack.c.b16 %v791, %v787
        %v896 = vpack.c.b16 %v792, %v788
        %v897 = vpack.c.b16 %v793, %v789
        %v898 = vpack.c.b16 %v798, %v794
        %v899 = vpack.c.b16 %v799, %v795
        %v900 = vpack.c.b16 %v800, %v796
        %v901 = vpack.c.b16 %v801, %v797
        %vm1002 = vcmask 130048
        %v1004 = vsel %vm1002, %v449, 0
        %v1007 = vsel %vm1002, %v453, 0
        %v1010 = vsel %vm1002, %v457, 0
        %v1013 = vsel %vm1002, %v461, 0
        %v1016 = vsel %vm1002, %v465, 0
        %v1019 = vsel %vm1002, %v469, 0
        %v1022 = vsel %vm1002, %v473, 0
        %v1025 = vsel %vm1002, %v477, 0
        %1027 = vmatprep.subr.bf16.mxu0 %v831
        %1028 = vmatpush1.bf16.msra.mxu0 %v830
        %1029 = vmatprep.subr.bf16.mxu0 %v827
        %1030 = vmatpush1.bf16.msra.mxu0 %v826
        %1031 = vmatprep.subr.bf16.mxu0 %v823
        %1032 = vmatpush1.bf16.msra.mxu0 %v822
        %1033 = vmatprep.subr.bf16.mxu0 %v819
        %1034 = vmatpush1.bf16.msra.mxu0 %v818
        %1035 = vmatprep.subr.bf16.mxu0 %v815
        %1036 = vmatpush1.bf16.msra.mxu0 %v814
        %1037 = vmatprep.subr.bf16.mxu0 %v811
        %1038 = vmatpush1.bf16.msra.mxu0 %v810
        %1039 = vmatprep.subr.bf16.mxu0 %v807
        %1040 = vmatpush1.bf16.msra.mxu0 %v806
        %1041 = vmatprep.subr.bf16.mxu0 %v803
        %1042 = vmatpush1.bf16.msra.mxu0 %v802
        %1043 = vmatprep.subr.bf16.mxu0 %v863
        %1044 = vmatpush2.bf16.msra.mxu0 %v862
        %1045 = vmatprep.subr.bf16.mxu0 %v859
        %1046 = vmatpush2.bf16.msra.mxu0 %v858
        %1047 = vmatprep.subr.bf16.mxu0 %v855
        %1048 = vmatpush2.bf16.msra.mxu0 %v854
        %1049 = vmatprep.subr.bf16.mxu0 %v851
        %1050 = vmatpush2.bf16.msra.mxu0 %v850
        %1051 = vmatprep.subr.bf16.mxu0 %v847
        %1052 = vmatpush2.bf16.msra.mxu0 %v846
        %1053 = vmatprep.subr.bf16.mxu0 %v843
        %1054 = vmatpush2.bf16.msra.mxu0 %v842
        %1055 = vmatprep.subr.bf16.mxu0 %v839
        %1056 = vmatpush2.bf16.msra.mxu0 %v838
        %1057 = vmatprep.subr.bf16.mxu0 %v835
        %1058 = vmatpush2.bf16.msra.mxu0 %v834
        %1059 = vmatprep.mubr.bf16.mxu0 %v447
        %1060 = vmatmul.mubr.bf16.gmra.mxu0 %v446
        %v1061 = vpop.f32.mrf.mxu0
        %v1062 = vadd.f32 0.0, %v1061
        %v1063 = vpop.f32.mrf.mxu0
        %v1064 = vadd.f32 0.0, %v1063
        %v1065 = vpop.f32.mrf.mxu0
        %v1066 = vadd.f32 0.0, %v1065
        %v1067 = vpop.f32.mrf.mxu0
        %v1068 = vadd.f32 0.0, %v1067
        %1069 = vmatprep.mubr.bf16.mxu0 %v451
        %1070 = vmatmul.mubr.bf16.gmra.mxu0 %v450
        %v1071 = vpop.f32.mrf.mxu0
        %v1072 = vadd.f32 0.0, %v1071
        %v1073 = vpop.f32.mrf.mxu0
        %v1074 = vadd.f32 0.0, %v1073
        %v1075 = vpop.f32.mrf.mxu0
        %v1076 = vadd.f32 0.0, %v1075
        %v1077 = vpop.f32.mrf.mxu0
        %v1078 = vadd.f32 0.0, %v1077
        %1079 = vmatprep.mubr.bf16.mxu0 %v455
        %1080 = vmatmul.mubr.bf16.gmra.mxu0 %v454
        %v1081 = vpop.f32.mrf.mxu0
        %v1082 = vadd.f32 0.0, %v1081
        %v1083 = vpop.f32.mrf.mxu0
        %v1084 = vadd.f32 0.0, %v1083
        %v1085 = vpop.f32.mrf.mxu0
        %v1086 = vadd.f32 0.0, %v1085
        %v1087 = vpop.f32.mrf.mxu0
        %v1088 = vadd.f32 0.0, %v1087
        %1089 = vmatprep.mubr.bf16.mxu0 %v459
        %1090 = vmatmul.mubr.bf16.gmra.mxu0 %v458
        %v1091 = vpop.f32.mrf.mxu0
        %v1092 = vadd.f32 0.0, %v1091
        %v1093 = vpop.f32.mrf.mxu0
        %v1094 = vadd.f32 0.0, %v1093
        %v1095 = vpop.f32.mrf.mxu0
        %v1096 = vadd.f32 0.0, %v1095
        %v1097 = vpop.f32.mrf.mxu0
        %v1098 = vadd.f32 0.0, %v1097
        %1099 = vmatprep.mubr.bf16.mxu0 %v463
        %1100 = vmatmul.mubr.bf16.gmra.mxu0 %v462
        %v1101 = vpop.f32.mrf.mxu0
        %v1102 = vadd.f32 0.0, %v1101
        %v1103 = vpop.f32.mrf.mxu0
        %v1104 = vadd.f32 0.0, %v1103
        %v1105 = vpop.f32.mrf.mxu0
        %v1106 = vadd.f32 0.0, %v1105
        %v1107 = vpop.f32.mrf.mxu0
        %v1108 = vadd.f32 0.0, %v1107
        %1109 = vmatprep.mubr.bf16.mxu0 %v467
        %1110 = vmatmul.mubr.bf16.gmra.mxu0 %v466
        %v1111 = vpop.f32.mrf.mxu0
        %v1112 = vadd.f32 0.0, %v1111
        %v1113 = vpop.f32.mrf.mxu0
        %v1114 = vadd.f32 0.0, %v1113
        %v1115 = vpop.f32.mrf.mxu0
        %v1116 = vadd.f32 0.0, %v1115
        %v1117 = vpop.f32.mrf.mxu0
        %v1118 = vadd.f32 0.0, %v1117
        %1119 = vmatprep.mubr.bf16.mxu0 %v471
        %1120 = vmatmul.mubr.bf16.gmra.mxu0 %v470
        %v1121 = vpop.f32.mrf.mxu0
        %v1122 = vadd.f32 0.0, %v1121
        %v1123 = vpop.f32.mrf.mxu0
        %v1124 = vadd.f32 0.0, %v1123
        %v1125 = vpop.f32.mrf.mxu0
        %v1126 = vadd.f32 0.0, %v1125
        %v1127 = vpop.f32.mrf.mxu0
        %v1128 = vadd.f32 0.0, %v1127
        %1129 = vmatprep.mubr.bf16.mxu0 %v475
        %1130 = vmatmul.mubr.bf16.gmra.mxu0 %v474
        %v1131 = vpop.f32.mrf.mxu0
        %v1132 = vadd.f32 0.0, %v1131
        %v1133 = vpop.f32.mrf.mxu0
        %v1134 = vadd.f32 0.0, %v1133
        %v1135 = vpop.f32.mrf.mxu0
        %v1136 = vadd.f32 0.0, %v1135
        %v1137 = vpop.f32.mrf.mxu0
        %v1138 = vadd.f32 0.0, %v1137
        %1139 = vdwg.mxu0
        %1140 = vmatprep.subr.bf16.mxu0 %v895
        %1141 = vmatpush1.bf16.msra.mxu0 %v894
        %1142 = vmatprep.subr.bf16.mxu0 %v891
        %1143 = vmatpush1.bf16.msra.mxu0 %v890
        %1144 = vmatprep.subr.bf16.mxu0 %v887
        %1145 = vmatpush1.bf16.msra.mxu0 %v886
        %1146 = vmatprep.subr.bf16.mxu0 %v883
        %1147 = vmatpush1.bf16.msra.mxu0 %v882
        %1148 = vmatprep.subr.bf16.mxu0 %v879
        %1149 = vmatpush1.bf16.msra.mxu0 %v878
        %1150 = vmatprep.subr.bf16.mxu0 %v875
        %1151 = vmatpush1.bf16.msra.mxu0 %v874
        %1152 = vmatprep.subr.bf16.mxu0 %v871
        %1153 = vmatpush1.bf16.msra.mxu0 %v870
        %1154 = vmatprep.subr.bf16.mxu0 %v867
        %1155 = vmatpush1.bf16.msra.mxu0 %v866
        %1156 = vmatprep.subr.bf16.mxu0 0
        %1157 = vmatpush2.bf16.msra.mxu0 0
        %1158 = vmatprep.subr.bf16.mxu0 0
        %1159 = vmatpush2.bf16.msra.mxu0 0
        %1160 = vmatprep.subr.bf16.mxu0 0
        %1161 = vmatpush2.bf16.msra.mxu0 0
        %1162 = vmatprep.subr.bf16.mxu0 0
        %1163 = vmatpush2.bf16.msra.mxu0 0
        %1164 = vmatprep.subr.bf16.mxu0 0
        %1165 = vmatpush2.bf16.msra.mxu0 0
        %1166 = vmatprep.subr.bf16.mxu0 0
        %1167 = vmatpush2.bf16.msra.mxu0 0
        %1168 = vmatprep.subr.bf16.mxu0 0
        %1169 = vmatpush2.bf16.msra.mxu0 0
        %1170 = vmatprep.subr.bf16.mxu0 %v899
        %1171 = vmatpush2.bf16.msra.mxu0 %v898
        %1172 = vmatprep.mubr.bf16.mxu0 %v1004
        %1173 = vmatmul.mubr.bf16.gmra.mxu0 %v448
        %v1174 = vpop.f32.mrf.mxu0
        %v1175 = vadd.f32 %v1062, %v1174
        %v1176 = vpop.f32.mrf.mxu0
        %v1177 = vadd.f32 %v1064, %v1176
        %v1178 = vpop.f32.mrf.mxu0
        %v1179 = vadd.f32 %v1066, %v1178
        %v1180 = vpop.f32.mrf.mxu0
        %v1181 = vadd.f32 %v1068, %v1180
        %1182 = vmatprep.mubr.bf16.mxu0 %v1007
        %1183 = vmatmul.mubr.bf16.gmra.mxu0 %v452
        %v1184 = vpop.f32.mrf.mxu0
        %v1185 = vadd.f32 %v1072, %v1184
        %v1186 = vpop.f32.mrf.mxu0
        %v1187 = vadd.f32 %v1074, %v1186
        %v1188 = vpop.f32.mrf.mxu0
        %v1189 = vadd.f32 %v1076, %v1188
        %v1190 = vpop.f32.mrf.mxu0
        %v1191 = vadd.f32 %v1078, %v1190
        %1192 = vmatprep.mubr.bf16.mxu0 %v1010
        %1193 = vmatmul.mubr.bf16.gmra.mxu0 %v456
        %v1194 = vpop.f32.mrf.mxu0
        %v1195 = vadd.f32 %v1082, %v1194
        %v1196 = vpop.f32.mrf.mxu0
        %v1197 = vadd.f32 %v1084, %v1196
        %v1198 = vpop.f32.mrf.mxu0
        %v1199 = vadd.f32 %v1086, %v1198
        %v1200 = vpop.f32.mrf.mxu0
        %v1201 = vadd.f32 %v1088, %v1200
        %1202 = vmatprep.mubr.bf16.mxu0 %v1013
        %1203 = vmatmul.mubr.bf16.gmra.mxu0 %v460
        %v1204 = vpop.f32.mrf.mxu0
        %v1205 = vadd.f32 %v1092, %v1204
        %v1206 = vpop.f32.mrf.mxu0
        %v1207 = vadd.f32 %v1094, %v1206
        %v1208 = vpop.f32.mrf.mxu0
        %v1209 = vadd.f32 %v1096, %v1208
        %v1210 = vpop.f32.mrf.mxu0
        %v1211 = vadd.f32 %v1098, %v1210
        %1212 = vmatprep.mubr.bf16.mxu0 %v1016
        %1213 = vmatmul.mubr.bf16.gmra.mxu0 %v464
        %v1214 = vpop.f32.mrf.mxu0
        %v1215 = vadd.f32 %v1102, %v1214
        %v1216 = vpop.f32.mrf.mxu0
        %v1217 = vadd.f32 %v1104, %v1216
        %v1218 = vpop.f32.mrf.mxu0
        %v1219 = vadd.f32 %v1106, %v1218
        %v1220 = vpop.f32.mrf.mxu0
        %v1221 = vadd.f32 %v1108, %v1220
        %1222 = vmatprep.mubr.bf16.mxu0 %v1019
        %1223 = vmatmul.mubr.bf16.gmra.mxu0 %v468
        %v1224 = vpop.f32.mrf.mxu0
        %v1225 = vadd.f32 %v1112, %v1224
        %v1226 = vpop.f32.mrf.mxu0
        %v1227 = vadd.f32 %v1114, %v1226
        %v1228 = vpop.f32.mrf.mxu0
        %v1229 = vadd.f32 %v1116, %v1228
        %v1230 = vpop.f32.mrf.mxu0
        %v1231 = vadd.f32 %v1118, %v1230
        %1232 = vmatprep.mubr.bf16.mxu0 %v1022
        %1233 = vmatmul.mubr.bf16.gmra.mxu0 %v472
        %v1234 = vpop.f32.mrf.mxu0
        %v1235 = vadd.f32 %v1122, %v1234
        %v1236 = vpop.f32.mrf.mxu0
        %v1237 = vadd.f32 %v1124, %v1236
        %v1238 = vpop.f32.mrf.mxu0
        %v1239 = vadd.f32 %v1126, %v1238
        %v1240 = vpop.f32.mrf.mxu0
        %v1241 = vadd.f32 %v1128, %v1240
        %1242 = vmatprep.mubr.bf16.mxu0 %v1025
        %1243 = vmatmul.mubr.bf16.gmra.mxu0 %v476
        %v1244 = vpop.f32.mrf.mxu0
        %v1245 = vadd.f32 %v1132, %v1244
        %v1246 = vpop.f32.mrf.mxu0
        %v1247 = vadd.f32 %v1134, %v1246
        %v1248 = vpop.f32.mrf.mxu0
        %v1249 = vadd.f32 %v1136, %v1248
        %v1250 = vpop.f32.mrf.mxu0
        %v1251 = vadd.f32 %v1138, %v1250
        %1252 = vdwg.mxu0
        %1253 = vmatprep.subr.bf16.mxu0 %v833
        %1254 = vmatpush1.bf16.msra.mxu0 %v832
        %1255 = vmatprep.subr.bf16.mxu0 %v829
        %1256 = vmatpush1.bf16.msra.mxu0 %v828
        %1257 = vmatprep.subr.bf16.mxu0 %v825
        %1258 = vmatpush1.bf16.msra.mxu0 %v824
        %1259 = vmatprep.subr.bf16.mxu0 %v821
        %1260 = vmatpush1.bf16.msra.mxu0 %v820
        %1261 = vmatprep.subr.bf16.mxu0 %v817
        %1262 = vmatpush1.bf16.msra.mxu0 %v816
        %1263 = vmatprep.subr.bf16.mxu0 %v813
        %1264 = vmatpush1.bf16.msra.mxu0 %v812
        %1265 = vmatprep.subr.bf16.mxu0 %v809
        %1266 = vmatpush1.bf16.msra.mxu0 %v808
        %1267 = vmatprep.subr.bf16.mxu0 %v805
        %1268 = vmatpush1.bf16.msra.mxu0 %v804
        %1269 = vmatprep.subr.bf16.mxu0 %v865
        %1270 = vmatpush2.bf16.msra.mxu0 %v864
        %1271 = vmatprep.subr.bf16.mxu0 %v861
        %1272 = vmatpush2.bf16.msra.mxu0 %v860
        %1273 = vmatprep.subr.bf16.mxu0 %v857
        %1274 = vmatpush2.bf16.msra.mxu0 %v856
        %1275 = vmatprep.subr.bf16.mxu0 %v853
        %1276 = vmatpush2.bf16.msra.mxu0 %v852
        %1277 = vmatprep.subr.bf16.mxu0 %v849
        %1278 = vmatpush2.bf16.msra.mxu0 %v848
        %1279 = vmatprep.subr.bf16.mxu0 %v845
        %1280 = vmatpush2.bf16.msra.mxu0 %v844
        %1281 = vmatprep.subr.bf16.mxu0 %v841
        %1282 = vmatpush2.bf16.msra.mxu0 %v840
        %1283 = vmatprep.subr.bf16.mxu0 %v837
        %1284 = vmatpush2.bf16.msra.mxu0 %v836
        %1285 = vmatprep.mubr.bf16.mxu0 %v447
        %1286 = vmatmul.mubr.bf16.gmra.mxu0 %v446
        %v1287 = vpop.f32.mrf.mxu0
        %v1288 = vadd.f32 0.0, %v1287
        %v1289 = vpop.f32.mrf.mxu0
        %v1290 = vadd.f32 0.0, %v1289
        %v1291 = vpop.f32.mrf.mxu0
        %v1292 = vadd.f32 0.0, %v1291
        %v1293 = vpop.f32.mrf.mxu0
        %v1294 = vadd.f32 0.0, %v1293
        %1295 = vmatprep.mubr.bf16.mxu0 %v451
        %1296 = vmatmul.mubr.bf16.gmra.mxu0 %v450
        %v1297 = vpop.f32.mrf.mxu0
        %v1298 = vadd.f32 0.0, %v1297
        %v1299 = vpop.f32.mrf.mxu0
        %v1300 = vadd.f32 0.0, %v1299
        %v1301 = vpop.f32.mrf.mxu0
        %v1302 = vadd.f32 0.0, %v1301
        %v1303 = vpop.f32.mrf.mxu0
        %v1304 = vadd.f32 0.0, %v1303
        %1305 = vmatprep.mubr.bf16.mxu0 %v455
        %1306 = vmatmul.mubr.bf16.gmra.mxu0 %v454
        %v1307 = vpop.f32.mrf.mxu0
        %v1308 = vadd.f32 0.0, %v1307
        %v1309 = vpop.f32.mrf.mxu0
        %v1310 = vadd.f32 0.0, %v1309
        %v1311 = vpop.f32.mrf.mxu0
        %v1312 = vadd.f32 0.0, %v1311
        %v1313 = vpop.f32.mrf.mxu0
        %v1314 = vadd.f32 0.0, %v1313
        %1315 = vmatprep.mubr.bf16.mxu0 %v459
        %1316 = vmatmul.mubr.bf16.gmra.mxu0 %v458
        %v1317 = vpop.f32.mrf.mxu0
        %v1318 = vadd.f32 0.0, %v1317
        %v1319 = vpop.f32.mrf.mxu0
        %v1320 = vadd.f32 0.0, %v1319
        %v1321 = vpop.f32.mrf.mxu0
        %v1322 = vadd.f32 0.0, %v1321
        %v1323 = vpop.f32.mrf.mxu0
        %v1324 = vadd.f32 0.0, %v1323
        %1325 = vmatprep.mubr.bf16.mxu0 %v463
        %1326 = vmatmul.mubr.bf16.gmra.mxu0 %v462
        %v1327 = vpop.f32.mrf.mxu0
        %v1328 = vadd.f32 0.0, %v1327
        %v1329 = vpop.f32.mrf.mxu0
        %v1330 = vadd.f32 0.0, %v1329
        %v1331 = vpop.f32.mrf.mxu0
        %v1332 = vadd.f32 0.0, %v1331
        %v1333 = vpop.f32.mrf.mxu0
        %v1334 = vadd.f32 0.0, %v1333
        %1335 = vmatprep.mubr.bf16.mxu0 %v467
        %1336 = vmatmul.mubr.bf16.gmra.mxu0 %v466
        %v1337 = vpop.f32.mrf.mxu0
        %v1338 = vadd.f32 0.0, %v1337
        %v1339 = vpop.f32.mrf.mxu0
        %v1340 = vadd.f32 0.0, %v1339
        %v1341 = vpop.f32.mrf.mxu0
        %v1342 = vadd.f32 0.0, %v1341
        %v1343 = vpop.f32.mrf.mxu0
        %v1344 = vadd.f32 0.0, %v1343
        %1345 = vmatprep.mubr.bf16.mxu0 %v471
        %1346 = vmatmul.mubr.bf16.gmra.mxu0 %v470
        %v1347 = vpop.f32.mrf.mxu0
        %v1348 = vadd.f32 0.0, %v1347
        %v1349 = vpop.f32.mrf.mxu0
        %v1350 = vadd.f32 0.0, %v1349
        %v1351 = vpop.f32.mrf.mxu0
        %v1352 = vadd.f32 0.0, %v1351
        %v1353 = vpop.f32.mrf.mxu0
        %v1354 = vadd.f32 0.0, %v1353
        %1355 = vmatprep.mubr.bf16.mxu0 %v475
        %1356 = vmatmul.mubr.bf16.gmra.mxu0 %v474
        %v1357 = vpop.f32.mrf.mxu0
        %v1358 = vadd.f32 0.0, %v1357
        %v1359 = vpop.f32.mrf.mxu0
        %v1360 = vadd.f32 0.0, %v1359
        %v1361 = vpop.f32.mrf.mxu0
        %v1362 = vadd.f32 0.0, %v1361
        %v1363 = vpop.f32.mrf.mxu0
        %v1364 = vadd.f32 0.0, %v1363
        %1365 = vdwg.mxu0
        %1366 = vmatprep.subr.bf16.mxu0 %v897
        %1367 = vmatpush1.bf16.msra.mxu0 %v896
        %1368 = vmatprep.subr.bf16.mxu0 %v893
        %1369 = vmatpush1.bf16.msra.mxu0 %v892
        %1370 = vmatprep.subr.bf16.mxu0 %v889
        %1371 = vmatpush1.bf16.msra.mxu0 %v888
        %1372 = vmatprep.subr.bf16.mxu0 %v885
        %1373 = vmatpush1.bf16.msra.mxu0 %v884
        %1374 = vmatprep.subr.bf16.mxu0 %v881
        %1375 = vmatpush1.bf16.msra.mxu0 %v880
        %1376 = vmatprep.subr.bf16.mxu0 %v877
        %1377 = vmatpush1.bf16.msra.mxu0 %v876
        %1378 = vmatprep.subr.bf16.mxu0 %v873
        %1379 = vmatpush1.bf16.msra.mxu0 %v872
        %1380 = vmatprep.subr.bf16.mxu0 %v869
        %1381 = vmatpush1.bf16.msra.mxu0 %v868
        %1382 = vmatprep.subr.bf16.mxu0 0
        %1383 = vmatpush2.bf16.msra.mxu0 0
        %1384 = vmatprep.subr.bf16.mxu0 0
        %1385 = vmatpush2.bf16.msra.mxu0 0
        %1386 = vmatprep.subr.bf16.mxu0 0
        %1387 = vmatpush2.bf16.msra.mxu0 0
        %1388 = vmatprep.subr.bf16.mxu0 0
        %1389 = vmatpush2.bf16.msra.mxu0 0
        %1390 = vmatprep.subr.bf16.mxu0 0
        %1391 = vmatpush2.bf16.msra.mxu0 0
        %1392 = vmatprep.subr.bf16.mxu0 0
        %1393 = vmatpush2.bf16.msra.mxu0 0
        %1394 = vmatprep.subr.bf16.mxu0 0
        %1395 = vmatpush2.bf16.msra.mxu0 0
        %1396 = vmatprep.subr.bf16.mxu0 %v901
        %1397 = vmatpush2.bf16.msra.mxu0 %v900
        %1398 = vmatprep.mubr.bf16.mxu0 %v1004
        %1399 = vmatmul.mubr.bf16.gmra.mxu0 %v448
        %v1400 = vpop.f32.mrf.mxu0
        %v1401 = vadd.f32 %v1288, %v1400
        %v1402 = vpop.f32.mrf.mxu0
        %v1403 = vadd.f32 %v1290, %v1402
        %v1404 = vpop.f32.mrf.mxu0
        %v1405 = vadd.f32 %v1292, %v1404
        %v1406 = vpop.f32.mrf.mxu0
        %v1407 = vadd.f32 %v1294, %v1406
        %1408 = vmatprep.mubr.bf16.mxu0 %v1007
        %1409 = vmatmul.mubr.bf16.gmra.mxu0 %v452
        %v1410 = vpop.f32.mrf.mxu0
        %v1411 = vadd.f32 %v1298, %v1410
        %v1412 = vpop.f32.mrf.mxu0
        %v1413 = vadd.f32 %v1300, %v1412
        %v1414 = vpop.f32.mrf.mxu0
        %v1415 = vadd.f32 %v1302, %v1414
        %v1416 = vpop.f32.mrf.mxu0
        %v1417 = vadd.f32 %v1304, %v1416
        %1418 = vmatprep.mubr.bf16.mxu0 %v1010
        %1419 = vmatmul.mubr.bf16.gmra.mxu0 %v456
        %v1420 = vpop.f32.mrf.mxu0
        %v1421 = vadd.f32 %v1308, %v1420
        %v1422 = vpop.f32.mrf.mxu0
        %v1423 = vadd.f32 %v1310, %v1422
        %v1424 = vpop.f32.mrf.mxu0
        %v1425 = vadd.f32 %v1312, %v1424
        %v1426 = vpop.f32.mrf.mxu0
        %v1427 = vadd.f32 %v1314, %v1426
        %1428 = vmatprep.mubr.bf16.mxu0 %v1013
        %1429 = vmatmul.mubr.bf16.gmra.mxu0 %v460
        %v1430 = vpop.f32.mrf.mxu0
        %v1431 = vadd.f32 %v1318, %v1430
        %v1432 = vpop.f32.mrf.mxu0
        %v1433 = vadd.f32 %v1320, %v1432
        %v1434 = vpop.f32.mrf.mxu0
        %v1435 = vadd.f32 %v1322, %v1434
        %v1436 = vpop.f32.mrf.mxu0
        %v1437 = vadd.f32 %v1324, %v1436
        %1438 = vmatprep.mubr.bf16.mxu0 %v1016
        %1439 = vmatmul.mubr.bf16.gmra.mxu0 %v464
        %v1440 = vpop.f32.mrf.mxu0
        %v1441 = vadd.f32 %v1328, %v1440
        %v1442 = vpop.f32.mrf.mxu0
        %v1443 = vadd.f32 %v1330, %v1442
        %v1444 = vpop.f32.mrf.mxu0
        %v1445 = vadd.f32 %v1332, %v1444
        %v1446 = vpop.f32.mrf.mxu0
        %v1447 = vadd.f32 %v1334, %v1446
        %1448 = vmatprep.mubr.bf16.mxu0 %v1019
        %1449 = vmatmul.mubr.bf16.gmra.mxu0 %v468
        %v1450 = vpop.f32.mrf.mxu0
        %v1451 = vadd.f32 %v1338, %v1450
        %v1452 = vpop.f32.mrf.mxu0
        %v1453 = vadd.f32 %v1340, %v1452
        %v1454 = vpop.f32.mrf.mxu0
        %v1455 = vadd.f32 %v1342, %v1454
        %v1456 = vpop.f32.mrf.mxu0
        %v1457 = vadd.f32 %v1344, %v1456
        %1458 = vmatprep.mubr.bf16.mxu0 %v1022
        %1459 = vmatmul.mubr.bf16.gmra.mxu0 %v472
        %v1460 = vpop.f32.mrf.mxu0
        %v1461 = vadd.f32 %v1348, %v1460
        %v1462 = vpop.f32.mrf.mxu0
        %v1463 = vadd.f32 %v1350, %v1462
        %v1464 = vpop.f32.mrf.mxu0
        %v1465 = vadd.f32 %v1352, %v1464
        %v1466 = vpop.f32.mrf.mxu0
        %v1467 = vadd.f32 %v1354, %v1466
        %1468 = vmatprep.mubr.bf16.mxu0 %v1025
        %1469 = vmatmul.mubr.bf16.gmra.mxu0 %v476
        %v1470 = vpop.f32.mrf.mxu0
        %v1471 = vadd.f32 %v1358, %v1470
        %v1472 = vpop.f32.mrf.mxu0
        %v1473 = vadd.f32 %v1360, %v1472
        %v1474 = vpop.f32.mrf.mxu0
        %v1475 = vadd.f32 %v1362, %v1474
        %v1476 = vpop.f32.mrf.mxu0
        %v1477 = vadd.f32 %v1364, %v1476
        %1478 = vdwg.mxu0
        %v1479 = vmul.f32 %v1175, %v1175
        %v1480 = vmul.f32 %v1177, %v1177
        %v1481 = vmul.f32 %v1179, %v1179
        %v1482 = vmul.f32 %v1181, %v1181
        %v1483 = vmul.f32 %v1185, %v1185
        %v1484 = vmul.f32 %v1187, %v1187
        %v1485 = vmul.f32 %v1189, %v1189
        %v1486 = vmul.f32 %v1191, %v1191
        %v1487 = vmul.f32 %v1195, %v1195
        %v1488 = vmul.f32 %v1197, %v1197
        %v1489 = vmul.f32 %v1199, %v1199
        %v1490 = vmul.f32 %v1201, %v1201
        %v1491 = vmul.f32 %v1205, %v1205
        %v1492 = vmul.f32 %v1207, %v1207
        %v1493 = vmul.f32 %v1209, %v1209
        %v1494 = vmul.f32 %v1211, %v1211
        %v1495 = vmul.f32 %v1215, %v1215
        %v1496 = vmul.f32 %v1217, %v1217
        %v1497 = vmul.f32 %v1219, %v1219
        %v1498 = vmul.f32 %v1221, %v1221
        %v1499 = vmul.f32 %v1225, %v1225
        %v1500 = vmul.f32 %v1227, %v1227
        %v1501 = vmul.f32 %v1229, %v1229
        %v1502 = vmul.f32 %v1231, %v1231
        %v1503 = vmul.f32 %v1235, %v1235
        %v1504 = vmul.f32 %v1237, %v1237
        %v1505 = vmul.f32 %v1239, %v1239
        %v1506 = vmul.f32 %v1241, %v1241
        %v1507 = vmul.f32 %v1245, %v1245
        %v1508 = vmul.f32 %v1247, %v1247
        %v1509 = vmul.f32 %v1249, %v1249
        %v1510 = vmul.f32 %v1251, %v1251
        %v1511 = vmul.f32 %v1401, %v1401
        %v1512 = vmul.f32 %v1403, %v1403
        %v1513 = vmul.f32 %v1405, %v1405
        %v1514 = vmul.f32 %v1407, %v1407
        %v1515 = vmul.f32 %v1411, %v1411
        %v1516 = vmul.f32 %v1413, %v1413
        %v1517 = vmul.f32 %v1415, %v1415
        %v1518 = vmul.f32 %v1417, %v1417
        %v1519 = vmul.f32 %v1421, %v1421
        %v1520 = vmul.f32 %v1423, %v1423
        %v1521 = vmul.f32 %v1425, %v1425
        %v1522 = vmul.f32 %v1427, %v1427
        %v1523 = vmul.f32 %v1431, %v1431
        %v1524 = vmul.f32 %v1433, %v1433
        %v1525 = vmul.f32 %v1435, %v1435
        %v1526 = vmul.f32 %v1437, %v1437
        %v1527 = vmul.f32 %v1441, %v1441
        %v1528 = vmul.f32 %v1443, %v1443
        %v1529 = vmul.f32 %v1445, %v1445
        %v1530 = vmul.f32 %v1447, %v1447
        %v1531 = vmul.f32 %v1451, %v1451
        %v1532 = vmul.f32 %v1453, %v1453
        %v1533 = vmul.f32 %v1455, %v1455
        %v1534 = vmul.f32 %v1457, %v1457
        %v1535 = vmul.f32 %v1461, %v1461
        %v1536 = vmul.f32 %v1463, %v1463
        %v1537 = vmul.f32 %v1465, %v1465
        %v1538 = vmul.f32 %v1467, %v1467
        %v1539 = vmul.f32 %v1471, %v1471
        %v1540 = vmul.f32 %v1473, %v1473
        %v1541 = vmul.f32 %v1475, %v1475
        %v1542 = vmul.f32 %v1477, %v1477
        %v1543 = vadd.f32 %v1479, %v1511
        %v1544 = vadd.f32 %v1480, %v1512
        %v1545 = vadd.f32 %v1481, %v1513
        %v1546 = vadd.f32 %v1482, %v1514
        %v1547 = vadd.f32 %v1483, %v1515
        %v1548 = vadd.f32 %v1484, %v1516
        %v1549 = vadd.f32 %v1485, %v1517
        %v1550 = vadd.f32 %v1486, %v1518
        %v1551 = vadd.f32 %v1487, %v1519
        %v1552 = vadd.f32 %v1488, %v1520
        %v1553 = vadd.f32 %v1489, %v1521
        %v1554 = vadd.f32 %v1490, %v1522
        %v1555 = vadd.f32 %v1491, %v1523
        %v1556 = vadd.f32 %v1492, %v1524
        %v1557 = vadd.f32 %v1493, %v1525
        %v1558 = vadd.f32 %v1494, %v1526
        %v1559 = vadd.f32 %v1495, %v1527
        %v1560 = vadd.f32 %v1496, %v1528
        %v1561 = vadd.f32 %v1497, %v1529
        %v1562 = vadd.f32 %v1498, %v1530
        %v1563 = vadd.f32 %v1499, %v1531
        %v1564 = vadd.f32 %v1500, %v1532
        %v1565 = vadd.f32 %v1501, %v1533
        %v1566 = vadd.f32 %v1502, %v1534
        %v1567 = vadd.f32 %v1503, %v1535
        %v1568 = vadd.f32 %v1504, %v1536
        %v1569 = vadd.f32 %v1505, %v1537
        %v1570 = vadd.f32 %v1506, %v1538
        %v1571 = vadd.f32 %v1507, %v1539
        %v1572 = vadd.f32 %v1508, %v1540
        %v1573 = vadd.f32 %v1509, %v1541
        %v1574 = vadd.f32 %v1510, %v1542
        %v1575 = vld [vmem:[#allocation2] sm:$0xff]
        %v1576 = vld [vmem:[#allocation2 + $0x8] sm:$0xff]
        %v1577 = vld [vmem:[#allocation2 + $0x10] sm:$0xff]
        %v1578 = vld [vmem:[#allocation2 + $0x18] sm:$0xff]
        %v1579 = vld [vmem:[#allocation2 + $0x20] sm:$0xff]
        %v1580 = vld [vmem:[#allocation2 + $0x28] sm:$0xff]
        %v1581 = vld [vmem:[#allocation2 + $0x30] sm:$0xff]
        %v1582 = vld [vmem:[#allocation2 + $0x38] sm:$0xff]
        %v1583 = vld [vmem:[#allocation2 + $0x40] sm:$0xff]
        %v1584 = vld [vmem:[#allocation2 + $0x48] sm:$0xff]
        %v1585 = vld [vmem:[#allocation2 + $0x50] sm:$0xff]
        %v1586 = vld [vmem:[#allocation2 + $0x58] sm:$0xff]
        %v1587 = vld [vmem:[#allocation2 + $0x60] sm:$0xff]
        %v1588 = vld [vmem:[#allocation2 + $0x68] sm:$0xff]
        %v1589 = vld [vmem:[#allocation2 + $0x70] sm:$0xff]
        %v1590 = vld [vmem:[#allocation2 + $0x78] sm:$0xff]
        %v1591 = vld [vmem:[#allocation2 + $0x80] sm:$0xff]
        %v1592 = vld [vmem:[#allocation2 + $0x88] sm:$0xff]
        %v1593 = vld [vmem:[#allocation2 + $0x90] sm:$0xff]
        %v1594 = vld [vmem:[#allocation2 + $0x98] sm:$0xff]
        %v1595 = vld [vmem:[#allocation2 + $0xa0] sm:$0xff]
        %v1596 = vld [vmem:[#allocation2 + $0xa8] sm:$0xff]
        %v1597 = vld [vmem:[#allocation2 + $0xb0] sm:$0xff]
        %v1598 = vld [vmem:[#allocation2 + $0xb8] sm:$0xff]
        %v1599 = vld [vmem:[#allocation2 + $0xc0] sm:$0xff]
        %v1600 = vld [vmem:[#allocation2 + $0xc8] sm:$0xff]
        %v1601 = vld [vmem:[#allocation2 + $0xd0] sm:$0xff]
        %v1602 = vld [vmem:[#allocation2 + $0xd8] sm:$0xff]
        %v1603 = vld [vmem:[#allocation2 + $0xe0] sm:$0xff]
        %v1604 = vld [vmem:[#allocation2 + $0xe8] sm:$0xff]
        %v1605 = vld [vmem:[#allocation2 + $0xf0] sm:$0xff]
        %v1606 = vld [vmem:[#allocation2 + $0xf8] sm:$0xff]
        %1607 = vmatprep.subr.mxu0 0.0
        %1608 = vmatpush1.msra.mxu0 %v1590
        %1609 = vmatprep.subr.mxu0 0.0
        %1610 = vmatpush1.msra.mxu0 %v1589
        %1611 = vmatprep.subr.mxu0 0.0
        %1612 = vmatpush1.msra.mxu0 %v1588
        %1613 = vmatprep.subr.mxu0 0.0
        %1614 = vmatpush1.msra.mxu0 %v1587
        %1615 = vmatprep.subr.mxu0 0.0
        %1616 = vmatpush1.msra.mxu0 %v1586
        %1617 = vmatprep.subr.mxu0 0.0
        %1618 = vmatpush1.msra.mxu0 %v1585
        %1619 = vmatprep.subr.mxu0 0.0
        %1620 = vmatpush1.msra.mxu0 %v1584
        %1621 = vmatprep.subr.mxu0 0.0
        %1622 = vmatpush1.msra.mxu0 %v1583
        %1623 = vmatprep.subr.mxu0 0.0
        %1624 = vmatpush1.msra.mxu0 %v1582
        %1625 = vmatprep.subr.mxu0 0.0
        %1626 = vmatpush1.msra.mxu0 %v1581
        %1627 = vmatprep.subr.mxu0 0.0
        %1628 = vmatpush1.msra.mxu0 %v1580
        %1629 = vmatprep.subr.mxu0 0.0
        %1630 = vmatpush1.msra.mxu0 %v1579
        %1631 = vmatprep.subr.mxu0 0.0
        %1632 = vmatpush1.msra.mxu0 %v1578
        %1633 = vmatprep.subr.mxu0 0.0
        %1634 = vmatpush1.msra.mxu0 %v1577
        %1635 = vmatprep.subr.mxu0 0.0
        %1636 = vmatpush1.msra.mxu0 %v1576
        %1637 = vmatprep.subr.mxu0 0.0
        %1638 = vmatpush1.msra.mxu0 %v1575
        %1639 = vmatprep.subr.mxu0 0.0
        %1640 = vmatpush2.msra.mxu0 %v1606
        %1641 = vmatprep.subr.mxu0 0.0
        %1642 = vmatpush2.msra.mxu0 %v1605
        %1643 = vmatprep.subr.mxu0 0.0
        %1644 = vmatpush2.msra.mxu0 %v1604
        %1645 = vmatprep.subr.mxu0 0.0
        %1646 = vmatpush2.msra.mxu0 %v1603
        %1647 = vmatprep.subr.mxu0 0.0
        %1648 = vmatpush2.msra.mxu0 %v1602
        %1649 = vmatprep.subr.mxu0 0.0
        %1650 = vmatpush2.msra.mxu0 %v1601
        %1651 = vmatprep.subr.mxu0 0.0
        %1652 = vmatpush2.msra.mxu0 %v1600
        %1653 = vmatprep.subr.mxu0 0.0
        %1654 = vmatpush2.msra.mxu0 %v1599
        %1655 = vmatprep.subr.mxu0 0.0
        %1656 = vmatpush2.msra.mxu0 %v1598
        %1657 = vmatprep.subr.mxu0 0.0
        %1658 = vmatpush2.msra.mxu0 %v1597
        %1659 = vmatprep.subr.mxu0 0.0
        %1660 = vmatpush2.msra.mxu0 %v1596
        %1661 = vmatprep.subr.mxu0 0.0
        %1662 = vmatpush2.msra.mxu0 %v1595
        %1663 = vmatprep.subr.mxu0 0.0
        %1664 = vmatpush2.msra.mxu0 %v1594
        %1665 = vmatprep.subr.mxu0 0.0
        %1666 = vmatpush2.msra.mxu0 %v1593
        %1667 = vmatprep.subr.mxu0 0.0
        %1668 = vmatpush2.msra.mxu0 %v1592
        %1669 = vmatprep.subr.mxu0 0.0
        %1670 = vmatpush2.msra.mxu0 %v1591
        %1671 = vmatprep.mubr.f32.mxu0 %v1544
        %1672 = vmatmul.mubr.f32.gmra.mxu0 %v1543
        %v1673 = vpop.f32.mrf.mxu0
        %v1674 = vadd.f32 0.001, %v1673
        %v1675 = vpop.f32.mrf.mxu0
        %1676 = vmatprep.mubr.f32.mxu0 %v1546
        %1677 = vmatmul.mubr.f32.gmra.mxu0 %v1545
        %v1678 = vpop.f32.mrf.mxu0
        %v1679 = vadd.f32 0.001, %v1678
        %v1680 = vpop.f32.mrf.mxu0
        %1681 = vmatprep.mubr.f32.mxu0 %v1548
        %1682 = vmatmul.mubr.f32.gmra.mxu0 %v1547
        %v1683 = vpop.f32.mrf.mxu0
        %v1684 = vadd.f32 0.001, %v1683
        %v1685 = vpop.f32.mrf.mxu0
        %1686 = vmatprep.mubr.f32.mxu0 %v1550
        %1687 = vmatmul.mubr.f32.gmra.mxu0 %v1549
        %v1688 = vpop.f32.mrf.mxu0
        %v1689 = vadd.f32 0.001, %v1688
        %v1690 = vpop.f32.mrf.mxu0
        %1691 = vmatprep.mubr.f32.mxu0 %v1552
        %1692 = vmatmul.mubr.f32.gmra.mxu0 %v1551
        %v1693 = vpop.f32.mrf.mxu0
        %v1694 = vadd.f32 0.001, %v1693
        %v1695 = vpop.f32.mrf.mxu0
        %1696 = vmatprep.mubr.f32.mxu0 %v1554
        %1697 = vmatmul.mubr.f32.gmra.mxu0 %v1553
        %v1698 = vpop.f32.mrf.mxu0
        %v1699 = vadd.f32 0.001, %v1698
        %v1700 = vpop.f32.mrf.mxu0
        %1701 = vmatprep.mubr.f32.mxu0 %v1556
        %1702 = vmatmul.mubr.f32.gmra.mxu0 %v1555
        %v1703 = vpop.f32.mrf.mxu0
        %v1704 = vadd.f32 0.001, %v1703
        %v1705 = vpop.f32.mrf.mxu0
        %1706 = vmatprep.mubr.f32.mxu0 %v1558
        %1707 = vmatmul.mubr.f32.gmra.mxu0 %v1557
        %v1708 = vpop.f32.mrf.mxu0
        %v1709 = vadd.f32 0.001, %v1708
        %v1710 = vpop.f32.mrf.mxu0
        %1711 = vmatprep.mubr.f32.mxu0 %v1560
        %1712 = vmatmul.mubr.f32.gmra.mxu0 %v1559
        %v1713 = vpop.f32.mrf.mxu0
        %v1714 = vadd.f32 0.001, %v1713
        %v1715 = vpop.f32.mrf.mxu0
        %1716 = vmatprep.mubr.f32.mxu0 %v1562
        %1717 = vmatmul.mubr.f32.gmra.mxu0 %v1561
        %v1718 = vpop.f32.mrf.mxu0
        %v1719 = vadd.f32 0.001, %v1718
        %v1720 = vpop.f32.mrf.mxu0
        %1721 = vmatprep.mubr.f32.mxu0 %v1564
        %1722 = vmatmul.mubr.f32.gmra.mxu0 %v1563
        %v1723 = vpop.f32.mrf.mxu0
        %v1724 = vadd.f32 0.001, %v1723
        %v1725 = vpop.f32.mrf.mxu0
        %1726 = vmatprep.mubr.f32.mxu0 %v1566
        %1727 = vmatmul.mubr.f32.gmra.mxu0 %v1565
        %v1728 = vpop.f32.mrf.mxu0
        %v1729 = vadd.f32 0.001, %v1728
        %v1730 = vpop.f32.mrf.mxu0
        %1731 = vmatprep.mubr.f32.mxu0 %v1568
        %1732 = vmatmul.mubr.f32.gmra.mxu0 %v1567
        %v1733 = vpop.f32.mrf.mxu0
        %v1734 = vadd.f32 0.001, %v1733
        %v1735 = vpop.f32.mrf.mxu0
        %1736 = vmatprep.mubr.f32.mxu0 %v1570
        %1737 = vmatmul.mubr.f32.gmra.mxu0 %v1569
        %v1738 = vpop.f32.mrf.mxu0
        %v1739 = vadd.f32 0.001, %v1738
        %v1740 = vpop.f32.mrf.mxu0
        %1741 = vmatprep.mubr.f32.mxu0 %v1572
        %1742 = vmatmul.mubr.f32.gmra.mxu0 %v1571
        %v1743 = vpop.f32.mrf.mxu0
        %v1744 = vadd.f32 0.001, %v1743
        %v1745 = vpop.f32.mrf.mxu0
        %1746 = vmatprep.mubr.f32.mxu0 %v1574
        %1747 = vmatmul.mubr.f32.gmra.mxu0 %v1573
        %v1748 = vpop.f32.mrf.mxu0
        %v1749 = vadd.f32 0.001, %v1748
        %v1750 = vpop.f32.mrf.mxu0
        %1751 = vdwg.mxu0
        %v1752 = vlog2.pop %v1674
        %v1753 = vmul.f32 %v1752, 0.6931472
        %v1754 = vlog2.pop %v1679
        %v1755 = vmul.f32 %v1754, 0.6931472
        %v1756 = vlog2.pop %v1684
        %v1757 = vmul.f32 %v1756, 0.6931472
        %v1758 = vlog2.pop %v1689
        %v1759 = vmul.f32 %v1758, 0.6931472
        %v1760 = vlog2.pop %v1694
        %v1761 = vmul.f32 %v1760, 0.6931472
        %v1762 = vlog2.pop %v1699
        %v1763 = vmul.f32 %v1762, 0.6931472
        %v1764 = vlog2.pop %v1704
        %v1765 = vmul.f32 %v1764, 0.6931472
        %v1766 = vlog2.pop %v1709
        %v1767 = vmul.f32 %v1766, 0.6931472
        %v1768 = vlog2.pop %v1714
        %v1769 = vmul.f32 %v1768, 0.6931472
        %v1770 = vlog2.pop %v1719
        %v1771 = vmul.f32 %v1770, 0.6931472
        %v1772 = vlog2.pop %v1724
        %v1773 = vmul.f32 %v1772, 0.6931472
        %v1774 = vlog2.pop %v1729
        %v1775 = vmul.f32 %v1774, 0.6931472
        %v1776 = vlog2.pop %v1734
        %v1777 = vmul.f32 %v1776, 0.6931472
        %v1778 = vlog2.pop %v1739
        %v1779 = vmul.f32 %v1778, 0.6931472
        %v1780 = vlog2.pop %v1744
        %v1781 = vmul.f32 %v1780, 0.6931472
        %v1782 = vlog2.pop %v1749
        %v1783 = vmul.f32 %v1782, 0.6931472
        %1784 = vxpose.xlu0.b32.start [1/16] %v1753, 128
        %1785 = vxpose.xlu0.b32.cont [2/16] %v1755, 128
        %1786 = vxpose.xlu0.b32.cont [3/16] %v1757, 128
        %1787 = vxpose.xlu0.b32.cont [4/16] %v1759, 128
        %1788 = vxpose.xlu0.b32.cont [5/16] %v1761, 128
        %1789 = vxpose.xlu0.b32.cont [6/16] %v1763, 128
        %1790 = vxpose.xlu0.b32.cont [7/16] %v1765, 128
        %1791 = vxpose.xlu0.b32.cont [8/16] %v1767, 128
        %1792 = vxpose.xlu0.b32.cont [9/16] %v1769, 128
        %1793 = vxpose.xlu0.b32.cont [10/16] %v1771, 128
        %1794 = vxpose.xlu0.b32.cont [11/16] %v1773, 128
        %1795 = vxpose.xlu0.b32.cont [12/16] %v1775, 128
        %1796 = vxpose.xlu0.b32.cont [13/16] %v1777, 128
        %1797 = vxpose.xlu0.b32.cont [14/16] %v1779, 128
        %1798 = vxpose.xlu0.b32.cont [15/16] %v1781, 128
        %1799 = vxpose.xlu0.b32.end [16/16] %v1783, 128
        %v1800 = vpop.trf.xlu0
        %v1801 = vpop.trf.xlu0
        %v1802 = vpop.trf.xlu0
        %v1803 = vpop.trf.xlu0
        %v1804 = vpop.trf.xlu0
        %v1805 = vpop.trf.xlu0
        %v1806 = vpop.trf.xlu0
        %v1807 = vpop.trf.xlu0
        %v1808 = vpop.trf.xlu0
        %v1809 = vpop.trf.xlu0
        %v1810 = vpop.trf.xlu0
        %v1811 = vpop.trf.xlu0
        %v1812 = vpop.trf.xlu0
        %v1813 = vpop.trf.xlu0
        %v1814 = vpop.trf.xlu0
        %v1815 = vpop.trf.xlu0
        %1816 = vst [vmem:[%s205] sm:$0xff] %v1800
        %1817 = vst [vmem:[%s205 + $0x8] sm:$0xff] %v1801
        %1818 = vst [vmem:[%s205 + $0x10] sm:$0xff] %v1802
        %1819 = vst [vmem:[%s205 + $0x18] sm:$0xff] %v1803
        %1820 = vst [vmem:[%s205 + $0x20] sm:$0xff] %v1804
        %1821 = vst [vmem:[%s205 + $0x28] sm:$0xff] %v1805
        %1822 = vst [vmem:[%s205 + $0x30] sm:$0xff] %v1806
        %1823 = vst [vmem:[%s205 + $0x38] sm:$0xff] %v1807
        %1824 = vst [vmem:[%s205 + $0x40] sm:$0xff] %v1808
        %1825 = vst [vmem:[%s205 + $0x48] sm:$0xff] %v1809
        %1826 = vst [vmem:[%s205 + $0x50] sm:$0xff] %v1810
        %1827 = vst [vmem:[%s205 + $0x58] sm:$0xff] %v1811
        %1828 = vst [vmem:[%s205 + $0x60] sm:$0xff] %v1812
        %1829 = vst [vmem:[%s205 + $0x68] sm:$0xff] %v1813
        %1830 = vst [vmem:[%s205 + $0x70] sm:$0xff] %v1814
        %1831 = vst [vmem:[%s205 + $0x78] sm:$0xff] %v1815
        %s1832 = sand.u32 %s110, 1
        %s1833 = scalar_lea.sflag [#allocation4], %s1832
        %s1834 = sand.u32 %s110, 1
        %s1835 = smul.addr %s1834, 128
        %s1836 = scalar_lea.vmem [#allocation5], %s1835
        // Predicated region
        $region37: #{tpu_custom_call.1} parent=31 // pred_check
          %p1837 = pneg %p120
        $region38: #{tpu_custom_call.1} parent=31 // pred_check_branch
          %1839 = sbr.rel (%p1837) target = $region40
        $region39: #{tpu_custom_call.1} parent=31 // pred_region
          %s1841 = ssub.s32 2048, 2048
          %1842 = vsyncadd %s1833, %s1841
          %s1843 = smul.addr %s22, 16
          %s1844 = sadd.s32 %s23, %s1843
          %s1845 = smul.addr %s1844, 128
          %s1846 = scalar_lea.hbm %s3, %s1845
          %s1847 = sshll.u32 %s1836, 4
          %s1848 = int_to_ptr.vmem [resolvable:$true] %s1847
          %1853 = dma.vmem_to_hbm [thread:$0]  %s1848, 2048, %s1846, %s1833, 128, 128, 8
        $region40: #{tpu_custom_call.1} parent=31 // pred_fallthru
          _
      $region32: #{tpu_custom_call.1} parent=5 // pred_fallthru
        _
      %p1854 = scmp.le.s32.totalorder 2, %s13
      // Predicated region
      $region41: #{tpu_custom_call.1} parent=5 // pred_check
        %p1855 = pneg %p1854
      $region42: #{tpu_custom_call.1} parent=5 // pred_check_branch
        %1857 = sbr.rel (%p1855) target = $region44
      $region43: #{tpu_custom_call.1} parent=5 // pred_region
        %s1858 = ssub.s32 %s13, 2
        // Predicated region
        $region45: #{tpu_custom_call.1} parent=43 // pred_check
          %p1859 = pneg %p126
        $region46: #{tpu_custom_call.1} parent=43 // pred_check_branch
          %1861 = sbr.rel (%p1859) target = $region48
        $region47: #{tpu_custom_call.1} parent=43 // pred_region
          %s1862 = sand.u32 %s111, 1
          %s1863 = scalar_lea.sflag [#allocation4], %s1862
          %s1864 = sand.u32 %s111, 1
          %s1865 = smul.addr %s1864, 128
          %s1866 = scalar_lea.vmem [#allocation5], %s1865
          %1867 = dma.done %s1863, 2048
        $region48: #{tpu_custom_call.1} parent=43 // pred_fallthru
          _
      $region44: #{tpu_custom_call.1} parent=5 // pred_fallthru
        _
    $region6: #{tpu_custom_call.1} parent=1 // loop_footer
      %s17 = sadd.s32 1, %s13
    $region7: #{tpu_custom_call.1} parent=1 // loop_footer_branch
      %12 = sbr.rel target = $region3
    $region8: #{tpu_custom_call.1} parent=1 // loop_exit
      _
    %1868 = vsyncpa [#allocation3], 1
    %s1869 = scalar_lea.sflag [#allocation3], 1
    %1870 = vsyncpa %s1869, 1
    %1871 = vsyncpa [#allocation4], 1
    %s1872 = scalar_lea.sflag [#allocation4], 1
    %1873 = vsyncpa %s1872, 1

</llo_original>
